<compile_context>
chip_gen: v6e
topology: v6e:2x2x1
jax: 0.10.0
libtpu: 0.0.40
codegen_flags: <defaults>
</compile_context>

<pallas_src>
import functools

import jax
import jax.numpy as jnp
from jax.experimental import pallas as pl
from jax.experimental.pallas import tpu as pltpu


# ----------------------------- Pallas kernel --------------------------------
def transformer_block_kernel(
    qkv_ref,      # (R=H*N*L, 3D) bf16, head-major rows, columns [q | k | v]
    qres_ref,     # (N*L, E)  f32  query kept in original layout for the residual
    maskb_ref,    # (H*N, L, L) f32 additive mask bias (0 keep / -1e20 drop)
    wqkv_ref,     # (3D, 3D)  bf16 block-diag [wq^T/sqrt(E) | wk^T | wv^T]
    wo_ref,       # (E, E)    bf16 fc_out W^T
    w1_ref,       # (E, FE)   bf16 FFN layer-1 W^T
    w2_ref,       # (FE, E)   bf16 FFN layer-2 W^T
    vec_ref,      # (8, E)    f32  rows: bo, g1, be1, bb2, g2, be2, 0, 0
    bb1_ref,      # (1, FE)   f32  FFN layer-1 bias
    out_ref,      # (N*L, E)  f32
    *, n_batch, seq_len, heads, head_dim, embed_size,
):
    N, L, H, D, E = n_batch, seq_len, heads, head_dim, embed_size
    B = H * N                                   # attention batch (head-major)
    bf16, f32 = jnp.bfloat16, jnp.float32
    dot = functools.partial(jnp.dot, preferred_element_type=f32)

    # --- Q/K/V per-head projections: one MXU pass over the block-diag weight.
    proj = dot(qkv_ref[...], wqkv_ref[...])                     # (R, 3D) f32
    qp = proj[:, 0 * D:1 * D].astype(bf16).reshape(B, L, D)     # scale already folded
    kp = proj[:, 1 * D:2 * D].astype(bf16).reshape(B, L, D)
    vp = proj[:, 2 * D:3 * D].astype(bf16).reshape(B, L, D)

    # --- attention core, all heads batched (batch = H*N). -------------------
    energy = jnp.einsum('bqd,bkd->bqk', qp, kp,
                        preferred_element_type=f32)             # (B, L, L)
    energy = energy + maskb_ref[...]                            # additive mask bias

    m = jnp.max(energy, axis=-1, keepdims=True)
    p = jnp.exp(energy - m)
    denom = jnp.sum(p, axis=-1, keepdims=True)
    attn = p * pl.reciprocal(denom, approx=True)                # softmax, f32

    ctx = jnp.einsum('bqk,bkd->bqd', attn.astype(bf16), vp,
                     preferred_element_type=f32)                # (B, L, D)

    # --- fc_out: head-concat folded into H accumulated partial matmuls ------
    # (ctx_h @ Wo^T[rows of head h]); weight slices are static sublane slices.
    wo = wo_ref[...]                                            # (E, E) bf16
    attn_out = jnp.zeros((N * L, E), f32)
    for h in range(H):                                          # static, H small
        ctx_h = ctx[h * N:(h + 1) * N].reshape(N * L, D).astype(bf16)
        attn_out = attn_out + dot(ctx_h, wo[h * D:(h + 1) * D, :])

    vec = vec_ref[...]                                          # (8, E) f32
    bo, g1, be1 = vec[0:1], vec[1:2], vec[2:3]
    bb2, g2, be2 = vec[3:4], vec[4:5], vec[5:6]
    attn_out = attn_out + bo                                    # fc_out bias

    def layernorm(x, g, b):
        mu = jnp.mean(x, axis=-1, keepdims=True)
        xc = x - mu
        var = jnp.mean(xc * xc, axis=-1, keepdims=True)
        return xc * jax.lax.rsqrt(var + 1e-5) * g + b

    # residual + norm1.  TODO(synk): nn.Dropout is identity here (eval-mode).
    x1 = layernorm(attn_out + qres_ref[...], g1, be1)

    # feed-forward: bf16 MXU matmuls, f32 accumulation / element-wise math.
    h1 = jnp.maximum(dot(x1.astype(bf16), w1_ref[...]) + bb1_ref[...], 0.0)
    ff = dot(h1.astype(bf16), w2_ref[...]) + bb2

    # residual + norm2
    out_ref[...] = layernorm(ff + x1, g2, be2).astype(out_ref.dtype)


# ------------------------------- wrapper -------------------------------------
def transformer_block(value, key, query, mask, params, *, heads):
    N, L, E = query.shape
    H = heads
    D = E // H
    FE = params["w1t"].shape[1]

    def head_major(x):
        # (N, L, E) -> (H*N*L, D); pure layout plumbing. row = (h*N + n)*L + l
        return x.reshape(N, L, H, D).transpose(2, 0, 1, 3).reshape(H * N * L, D)

    # Single bf16 activation slab, columns [q | k | v] (halves activation DMA
    # bytes and removes in-kernel casts). f32 query kept for the residual.
    qkv_hm = jnp.concatenate(
        [head_major(query), head_major(key), head_major(value)],
        axis=-1).astype(jnp.bfloat16)                            # (R, 3D)
    q_res = query.reshape(N * L, E)

    # Additive mask bias precomputed once (0 keep / -1e20 drop), broadcast over
    # heads host-side so the kernel applies it with a single add.
    mbias = jnp.where(mask == 0.0, jnp.float32(-1e20), jnp.float32(0.0))
    mbias_hm = jnp.broadcast_to(mbias[None], (H, N, L, L)).reshape(H * N, L, L)

    kern = functools.partial(
        transformer_block_kernel,
        n_batch=N, seq_len=L, heads=H, head_dim=D, embed_size=E)

    # Advisory cost estimate for the XLA scheduler.
    flops = 2 * N * L * (3 * D * 3 * D + 2 * H * L * D + E * E + 2 * E * FE)
    bytes_accessed = (
        qkv_hm.size * 2 + q_res.size * 4 + mbias_hm.size * 4
        + params["w_qkv"].size * 2 + params["wot"].size * 2
        + params["w1t"].size * 2 + params["w2t"].size * 2
        + params["vecs"].size * 4 + params["bb1"].size * 4
        + N * L * E * 4)
    cost = pl.CostEstimate(flops=int(flops),
                           transcendentals=int(H * N * L * L),
                           bytes_accessed=int(bytes_accessed))

    vmem = pl.BlockSpec(memory_space=pltpu.MemorySpace.VMEM)
    out = pl.pallas_call(
        kern,
        out_shape=jax.ShapeDtypeStruct((N * L, E), jnp.float32),
        in_specs=[vmem] * 9,
        out_specs=vmem,
        cost_estimate=cost,
    )(qkv_hm, q_res, mbias_hm,
      params["w_qkv"], params["wot"], params["w1t"], params["w2t"],
      params["vecs"], params["bb1"])
    return out.reshape(N, L, E)


# --------------------------- parameter init ----------------------------------
def init_params(rng, embed_size, heads, forward_expansion):
    E = embed_size
    D = E // heads
    FE = forward_expansion * E
    ks = jax.random.split(rng, 10)

    def lin(k, fan_in, shape):  # PyTorch-style uniform(-1/sqrt(fan_in), 1/sqrt(fan_in))
        bound = 1.0 / (fan_in ** 0.5)
        return jax.random.uniform(k, shape, jnp.float32, -bound, bound)

    wv = lin(ks[0], D, (D, D))
    wk = lin(ks[1], D, (D, D))
    wq = lin(ks[2], D, (D, D))
    wo = lin(ks[3], E, (E, E))
    bo = lin(ks[4], E, (E,))
    w1 = lin(ks[5], E, (FE, E))
    b1 = lin(ks[6], E, (FE,))
    w2 = lin(ks[7], FE, (E, FE))
    b2 = lin(ks[8], FE, (E,))

    bf16 = jnp.bfloat16
    Z = jnp.zeros((D, D), jnp.float32)
    inv_sqrt_e = 1.0 / (E ** 0.5)
    # Block-diagonal [q | k | v] projection; softmax 1/sqrt(E) folded into Q block.
    w_qkv = jnp.block([[wq.T * inv_sqrt_e, Z, Z],
                       [Z, wk.T, Z],
                       [Z, Z, wv.T]]).astype(bf16)               # (3D, 3D)

    g1 = jnp.ones((E,), jnp.float32); be1 = jnp.zeros((E,), jnp.float32)
    g2 = jnp.ones((E,), jnp.float32); be2 = jnp.zeros((E,), jnp.float32)
    zeros_e = jnp.zeros((E,), jnp.float32)
    # Pack the eight small f32 vectors into one (8, E) slab (one DMA).
    vecs = jnp.stack([bo, g1, be1, b2, g2, be2, zeros_e, zeros_e])   # (8, E)

    raw = dict(wv=wv, wk=wk, wq=wq, wo=wo, bo=bo, w1=w1, b1=b1, w2=w2, b2=b2)
    packed = {
        "w_qkv": w_qkv,
        "wot": wo.T.astype(bf16),            # (E, E)
        "w1t": w1.T.astype(bf16),            # (E, FE)
        "w2t": w2.T.astype(bf16),            # (FE, E)
        "vecs": vecs,                        # (8, E) f32
        "bb1": b1.reshape(1, FE),            # (1, FE) f32
    }
    return packed, raw


# --------------------------- pure-JAX reference -------------------------------
def reference(value, key, query, mask, raw, *, heads):
    N, L, E = query.shape
    D = E // heads

    def proj(x, w):  # Linear(D, D, bias=False): y = x @ W^T, per head
        return jnp.einsum("nlhd,ed->nlhe", x.reshape(N, L, heads, D), w)

    vp = proj(value, raw["wv"])
    kp = proj(key, raw["wk"])
    qp = proj(query, raw["wq"])

    energy = jnp.einsum("nqhd,nkhd->nhqk", qp, kp)
    energy = jnp.where(mask[:, None] == 0.0, jnp.float32(-1e20), energy)
    attn = jax.nn.softmax(energy / (E ** 0.5), axis=3)
    out = jnp.einsum("nhql,nlhd->nqhd", attn, vp).reshape(N, L, E)
    out = out @ raw["wo"].T + raw["bo"]

    def layernorm(x):
        mu = jnp.mean(x, axis=-1, keepdims=True)
        var = jnp.mean((x - mu) ** 2, axis=-1, keepdims=True)
        return (x - mu) / jnp.sqrt(var + 1e-5)

    x1 = layernorm(out + query)
    h1 = jnp.maximum(x1 @ raw["w1"].T + raw["b1"], 0.0)
    ff = h1 @ raw["w2"].T + raw["b2"]
    return layernorm(ff + x1)


# --------------------------------- main ---------------------------------------
if __name__ == "__main__":
    N, L, E = 2, 8, 32
    HEADS = 8
    FWD_EXP = 4

    root = jax.random.PRNGKey(0)
    k_v, k_k, k_q, k_p = jax.random.split(root, 4)

    value = jax.random.normal(k_v, (N, L, E), jnp.float32)
    key_in = jax.random.normal(k_k, (N, L, E), jnp.float32)
    query = jax.random.normal(k_q, (N, L, E), jnp.float32)
    # causal-style mask: (N, Lq, Lk), 0 => masked out (broadcast over heads)
    mask = jnp.broadcast_to(jnp.tril(jnp.ones((L, L), jnp.float32)), (N, L, L))

    params, raw = init_params(k_p, E, HEADS, FWD_EXP)

    out = transformer_block(value, key_in, query, mask, params, heads=HEADS)
    out = jax.block_until_ready(out)

    ref = reference(value, key_in, query, mask, raw, heads=HEADS)
    assert out.shape == (N, L, E)
    # bf16 matmul operands + approx reciprocal -> slightly loosened tolerance.
    assert jnp.allclose(out, ref, atol=5e-2, rtol=5e-2), (
        f"max abs err = {jnp.max(jnp.abs(out - ref))}")

    print("KERNEL_OK")
</pallas_src>

<mosaic_0001>
module attributes {stable_mosaic.version = 11 : i64} {
  func.func @transformer_block_kernel(%arg0: memref<128x12xbf16, #tpu.memory_space<vmem>>, %arg1: memref<16x32xf32, #tpu.memory_space<vmem>>, %arg2: memref<16x8x8xf32, #tpu.memory_space<vmem>>, %arg3: memref<12x12xbf16, #tpu.memory_space<vmem>>, %arg4: memref<32x32xbf16, #tpu.memory_space<vmem>>, %arg5: memref<32x128xbf16, #tpu.memory_space<vmem>>, %arg6: memref<128x32xbf16, #tpu.memory_space<vmem>>, %arg7: memref<8x32xf32, #tpu.memory_space<vmem>>, %arg8: memref<1x128xf32, #tpu.memory_space<vmem>>, %arg9: memref<16x32xf32, #tpu.memory_space<vmem>>) attributes {dimension_semantics = [], scalar_prefetch = 0 : i64, scratch_operands = 0 : i64, tpu.core_type = #tpu.core_type<tc>} {
    %c0 = arith.constant 0 : index
    %c0_0 = arith.constant 0 : index
    %0 = vector.load %arg0[%c0, %c0_0] : memref<128x12xbf16, #tpu.memory_space<vmem>>, vector<128x12xbf16>
    %c0_1 = arith.constant 0 : index
    %c0_2 = arith.constant 0 : index
    %1 = vector.load %arg3[%c0_1, %c0_2] : memref<12x12xbf16, #tpu.memory_space<vmem>>, vector<12x12xbf16>
    %cst = arith.constant dense<0.000000e+00> : vector<128x12xf32>
    %2 = tpu.matmul %0, %1, %cst {dimension_numbers = #tpu.dot_dimension_numbers<[1], [0], [0], [1], [0, 0, 1, 1], [], []>} : vector<128x12xbf16>, vector<12x12xbf16>, vector<128x12xf32> -> vector<128x12xf32>
    %3 = vector.extract_strided_slice %2 {offsets = [0, 0], sizes = [128, 4], strides = [1, 1]} : vector<128x12xf32> to vector<128x4xf32>
    %4 = arith.truncf %3 : vector<128x4xf32> to vector<128x4xbf16>
    %5 = vector.shape_cast %4 : vector<128x4xbf16> to vector<16x8x4xbf16>
    %6 = vector.extract_strided_slice %2 {offsets = [0, 4], sizes = [128, 4], strides = [1, 1]} : vector<128x12xf32> to vector<128x4xf32>
    %7 = arith.truncf %6 : vector<128x4xf32> to vector<128x4xbf16>
    %8 = vector.shape_cast %7 : vector<128x4xbf16> to vector<16x8x4xbf16>
    %9 = vector.extract_strided_slice %2 {offsets = [0, 8], sizes = [128, 4], strides = [1, 1]} : vector<128x12xf32> to vector<128x4xf32>
    %10 = arith.truncf %9 : vector<128x4xf32> to vector<128x4xbf16>
    %11 = vector.shape_cast %10 : vector<128x4xbf16> to vector<16x8x4xbf16>
    "tpu.trace_start"() <{level = 10 : i32, message = "bqd,bkd->bqk"}> : () -> ()
    %cst_3 = arith.constant dense<0.000000e+00> : vector<16x8x8xf32>
    %12 = tpu.matmul %5, %8, %cst_3 {dimension_numbers = #tpu.dot_dimension_numbers<[2], [2], [1], [1], [0, 0, 0, 1, 1, 1], [0], [0]>} : vector<16x8x4xbf16>, vector<16x8x4xbf16>, vector<16x8x8xf32> -> vector<16x8x8xf32>
    "tpu.trace_stop"() : () -> ()
    %c0_4 = arith.constant 0 : index
    %c0_5 = arith.constant 0 : index
    %c0_6 = arith.constant 0 : index
    %13 = vector.load %arg2[%c0_4, %c0_5, %c0_6] : memref<16x8x8xf32, #tpu.memory_space<vmem>>, vector<16x8x8xf32>
    %14 = arith.addf %12, %13 : vector<16x8x8xf32>
    %cst_7 = arith.constant dense<0xFF800000> : vector<16x8xf32>
    %15 = vector.multi_reduction <maximumf>, %14, %cst_7 [2] : vector<16x8x8xf32> to vector<16x8xf32>
    %16 = vector.shape_cast %15 : vector<16x8xf32> to vector<16x8x1xf32>
    %17 = vector.broadcast %16 : vector<16x8x1xf32> to vector<16x8x8xf32>
    %18 = arith.subf %14, %17 : vector<16x8x8xf32>
    %19 = math.exp %18 : vector<16x8x8xf32>
    %cst_8 = arith.constant dense<0.000000e+00> : vector<16x8xf32>
    %20 = vector.multi_reduction <add>, %19, %cst_8 [2] : vector<16x8x8xf32> to vector<16x8xf32>
    %21 = vector.shape_cast %20 : vector<16x8xf32> to vector<16x8x1xf32>
    %22 = tpu.reciprocal %21 {approx = true} : vector<16x8x1xf32> -> vector<16x8x1xf32>
    %23 = vector.broadcast %22 : vector<16x8x1xf32> to vector<16x8x8xf32>
    %24 = arith.mulf %19, %23 : vector<16x8x8xf32>
    %25 = arith.truncf %24 : vector<16x8x8xf32> to vector<16x8x8xbf16>
    "tpu.trace_start"() <{level = 10 : i32, message = "bqk,bkd->bqd"}> : () -> ()
    %cst_9 = arith.constant dense<0.000000e+00> : vector<16x8x4xf32>
    %26 = tpu.matmul %25, %11, %cst_9 {dimension_numbers = #tpu.dot_dimension_numbers<[2], [1], [1], [2], [0, 0, 0, 1, 1, 2], [0], [0]>} : vector<16x8x8xbf16>, vector<16x8x4xbf16>, vector<16x8x4xf32> -> vector<16x8x4xf32>
    "tpu.trace_stop"() : () -> ()
    %c0_10 = arith.constant 0 : index
    %c0_11 = arith.constant 0 : index
    %27 = vector.load %arg4[%c0_10, %c0_11] : memref<32x32xbf16, #tpu.memory_space<vmem>>, vector<32x32xbf16>
    %cst_12 = arith.constant 0.000000e+00 : f32
    %28 = vector.broadcast %cst_12 : f32 to vector<16x32xf32>
    %29 = vector.extract_strided_slice %26 {offsets = [0, 0, 0], sizes = [2, 8, 4], strides = [1, 1, 1]} : vector<16x8x4xf32> to vector<2x8x4xf32>
    %30 = vector.shape_cast %29 : vector<2x8x4xf32> to vector<16x4xf32>
    %31 = arith.truncf %30 : vector<16x4xf32> to vector<16x4xbf16>
    %32 = vector.extract_strided_slice %27 {offsets = [0, 0], sizes = [4, 32], strides = [1, 1]} : vector<32x32xbf16> to vector<4x32xbf16>
    %cst_13 = arith.constant dense<0.000000e+00> : vector<16x32xf32>
    %33 = tpu.matmul %31, %32, %cst_13 {dimension_numbers = #tpu.dot_dimension_numbers<[1], [0], [0], [1], [0, 0, 1, 1], [], []>} : vector<16x4xbf16>, vector<4x32xbf16>, vector<16x32xf32> -> vector<16x32xf32>
    %34 = arith.addf %28, %33 : vector<16x32xf32>
    %35 = vector.extract_strided_slice %26 {offsets = [2, 0, 0], sizes = [2, 8, 4], strides = [1, 1, 1]} : vector<16x8x4xf32> to vector<2x8x4xf32>
    %36 = vector.shape_cast %35 : vector<2x8x4xf32> to vector<16x4xf32>
    %37 = arith.truncf %36 : vector<16x4xf32> to vector<16x4xbf16>
    %38 = vector.extract_strided_slice %27 {offsets = [4, 0], sizes = [4, 32], strides = [1, 1]} : vector<32x32xbf16> to vector<4x32xbf16>
    %cst_14 = arith.constant dense<0.000000e+00> : vector<16x32xf32>
    %39 = tpu.matmul %37, %38, %cst_14 {dimension_numbers = #tpu.dot_dimension_numbers<[1], [0], [0], [1], [0, 0, 1, 1], [], []>} : vector<16x4xbf16>, vector<4x32xbf16>, vector<16x32xf32> -> vector<16x32xf32>
    %40 = arith.addf %34, %39 : vector<16x32xf32>
    %41 = vector.extract_strided_slice %26 {offsets = [4, 0, 0], sizes = [2, 8, 4], strides = [1, 1, 1]} : vector<16x8x4xf32> to vector<2x8x4xf32>
    %42 = vector.shape_cast %41 : vector<2x8x4xf32> to vector<16x4xf32>
    %43 = arith.truncf %42 : vector<16x4xf32> to vector<16x4xbf16>
    %44 = vector.extract_strided_slice %27 {offsets = [8, 0], sizes = [4, 32], strides = [1, 1]} : vector<32x32xbf16> to vector<4x32xbf16>
    %cst_15 = arith.constant dense<0.000000e+00> : vector<16x32xf32>
    %45 = tpu.matmul %43, %44, %cst_15 {dimension_numbers = #tpu.dot_dimension_numbers<[1], [0], [0], [1], [0, 0, 1, 1], [], []>} : vector<16x4xbf16>, vector<4x32xbf16>, vector<16x32xf32> -> vector<16x32xf32>
    %46 = arith.addf %40, %45 : vector<16x32xf32>
    %47 = vector.extract_strided_slice %26 {offsets = [6, 0, 0], sizes = [2, 8, 4], strides = [1, 1, 1]} : vector<16x8x4xf32> to vector<2x8x4xf32>
    %48 = vector.shape_cast %47 : vector<2x8x4xf32> to vector<16x4xf32>
    %49 = arith.truncf %48 : vector<16x4xf32> to vector<16x4xbf16>
    %50 = vector.extract_strided_slice %27 {offsets = [12, 0], sizes = [4, 32], strides = [1, 1]} : vector<32x32xbf16> to vector<4x32xbf16>
    %cst_16 = arith.constant dense<0.000000e+00> : vector<16x32xf32>
    %51 = tpu.matmul %49, %50, %cst_16 {dimension_numbers = #tpu.dot_dimension_numbers<[1], [0], [0], [1], [0, 0, 1, 1], [], []>} : vector<16x4xbf16>, vector<4x32xbf16>, vector<16x32xf32> -> vector<16x32xf32>
    %52 = arith.addf %46, %51 : vector<16x32xf32>
    %53 = vector.extract_strided_slice %26 {offsets = [8, 0, 0], sizes = [2, 8, 4], strides = [1, 1, 1]} : vector<16x8x4xf32> to vector<2x8x4xf32>
    %54 = vector.shape_cast %53 : vector<2x8x4xf32> to vector<16x4xf32>
    %55 = arith.truncf %54 : vector<16x4xf32> to vector<16x4xbf16>
    %56 = vector.extract_strided_slice %27 {offsets = [16, 0], sizes = [4, 32], strides = [1, 1]} : vector<32x32xbf16> to vector<4x32xbf16>
    %cst_17 = arith.constant dense<0.000000e+00> : vector<16x32xf32>
    %57 = tpu.matmul %55, %56, %cst_17 {dimension_numbers = #tpu.dot_dimension_numbers<[1], [0], [0], [1], [0, 0, 1, 1], [], []>} : vector<16x4xbf16>, vector<4x32xbf16>, vector<16x32xf32> -> vector<16x32xf32>
    %58 = arith.addf %52, %57 : vector<16x32xf32>
    %59 = vector.extract_strided_slice %26 {offsets = [10, 0, 0], sizes = [2, 8, 4], strides = [1, 1, 1]} : vector<16x8x4xf32> to vector<2x8x4xf32>
    %60 = vector.shape_cast %59 : vector<2x8x4xf32> to vector<16x4xf32>
    %61 = arith.truncf %60 : vector<16x4xf32> to vector<16x4xbf16>
    %62 = vector.extract_strided_slice %27 {offsets = [20, 0], sizes = [4, 32], strides = [1, 1]} : vector<32x32xbf16> to vector<4x32xbf16>
    %cst_18 = arith.constant dense<0.000000e+00> : vector<16x32xf32>
    %63 = tpu.matmul %61, %62, %cst_18 {dimension_numbers = #tpu.dot_dimension_numbers<[1], [0], [0], [1], [0, 0, 1, 1], [], []>} : vector<16x4xbf16>, vector<4x32xbf16>, vector<16x32xf32> -> vector<16x32xf32>
    %64 = arith.addf %58, %63 : vector<16x32xf32>
    %65 = vector.extract_strided_slice %26 {offsets = [12, 0, 0], sizes = [2, 8, 4], strides = [1, 1, 1]} : vector<16x8x4xf32> to vector<2x8x4xf32>
    %66 = vector.shape_cast %65 : vector<2x8x4xf32> to vector<16x4xf32>
    %67 = arith.truncf %66 : vector<16x4xf32> to vector<16x4xbf16>
    %68 = vector.extract_strided_slice %27 {offsets = [24, 0], sizes = [4, 32], strides = [1, 1]} : vector<32x32xbf16> to vector<4x32xbf16>
    %cst_19 = arith.constant dense<0.000000e+00> : vector<16x32xf32>
    %69 = tpu.matmul %67, %68, %cst_19 {dimension_numbers = #tpu.dot_dimension_numbers<[1], [0], [0], [1], [0, 0, 1, 1], [], []>} : vector<16x4xbf16>, vector<4x32xbf16>, vector<16x32xf32> -> vector<16x32xf32>
    %70 = arith.addf %64, %69 : vector<16x32xf32>
    %71 = vector.extract_strided_slice %26 {offsets = [14, 0, 0], sizes = [2, 8, 4], strides = [1, 1, 1]} : vector<16x8x4xf32> to vector<2x8x4xf32>
    %72 = vector.shape_cast %71 : vector<2x8x4xf32> to vector<16x4xf32>
    %73 = arith.truncf %72 : vector<16x4xf32> to vector<16x4xbf16>
    %74 = vector.extract_strided_slice %27 {offsets = [28, 0], sizes = [4, 32], strides = [1, 1]} : vector<32x32xbf16> to vector<4x32xbf16>
    %cst_20 = arith.constant dense<0.000000e+00> : vector<16x32xf32>
    %75 = tpu.matmul %73, %74, %cst_20 {dimension_numbers = #tpu.dot_dimension_numbers<[1], [0], [0], [1], [0, 0, 1, 1], [], []>} : vector<16x4xbf16>, vector<4x32xbf16>, vector<16x32xf32> -> vector<16x32xf32>
    %76 = arith.addf %70, %75 : vector<16x32xf32>
    %c0_21 = arith.constant 0 : index
    %c0_22 = arith.constant 0 : index
    %77 = vector.load %arg7[%c0_21, %c0_22] : memref<8x32xf32, #tpu.memory_space<vmem>>, vector<8x32xf32>
    %78 = vector.extract_strided_slice %77 {offsets = [0, 0], sizes = [1, 32], strides = [1, 1]} : vector<8x32xf32> to vector<1x32xf32>
    %79 = vector.extract_strided_slice %77 {offsets = [1, 0], sizes = [1, 32], strides = [1, 1]} : vector<8x32xf32> to vector<1x32xf32>
    %80 = vector.extract_strided_slice %77 {offsets = [2, 0], sizes = [1, 32], strides = [1, 1]} : vector<8x32xf32> to vector<1x32xf32>
    %81 = vector.extract_strided_slice %77 {offsets = [3, 0], sizes = [1, 32], strides = [1, 1]} : vector<8x32xf32> to vector<1x32xf32>
    %82 = vector.extract_strided_slice %77 {offsets = [4, 0], sizes = [1, 32], strides = [1, 1]} : vector<8x32xf32> to vector<1x32xf32>
    %83 = vector.extract_strided_slice %77 {offsets = [5, 0], sizes = [1, 32], strides = [1, 1]} : vector<8x32xf32> to vector<1x32xf32>
    %84 = vector.broadcast %78 : vector<1x32xf32> to vector<16x32xf32>
    %85 = arith.addf %76, %84 : vector<16x32xf32>
    %c0_23 = arith.constant 0 : index
    %c0_24 = arith.constant 0 : index
    %86 = vector.load %arg1[%c0_23, %c0_24] : memref<16x32xf32, #tpu.memory_space<vmem>>, vector<16x32xf32>
    %87 = arith.addf %85, %86 : vector<16x32xf32>
    %cst_25 = arith.constant dense<0.000000e+00> : vector<16xf32>
    %88 = vector.multi_reduction <add>, %87, %cst_25 [1] : vector<16x32xf32> to vector<16xf32>
    %89 = vector.shape_cast %88 : vector<16xf32> to vector<16x1xf32>
    %cst_26 = arith.constant 3.200000e+01 : f32
    %90 = vector.broadcast %cst_26 : f32 to vector<16x1xf32>
    %91 = arith.divf %89, %90 : vector<16x1xf32>
    %92 = vector.broadcast %91 : vector<16x1xf32> to vector<16x32xf32>
    %93 = arith.subf %87, %92 : vector<16x32xf32>
    %94 = arith.mulf %93, %93 : vector<16x32xf32>
    %cst_27 = arith.constant dense<0.000000e+00> : vector<16xf32>
    %95 = vector.multi_reduction <add>, %94, %cst_27 [1] : vector<16x32xf32> to vector<16xf32>
    %96 = vector.shape_cast %95 : vector<16xf32> to vector<16x1xf32>
    %cst_28 = arith.constant 3.200000e+01 : f32
    %97 = vector.broadcast %cst_28 : f32 to vector<16x1xf32>
    %98 = arith.divf %96, %97 : vector<16x1xf32>
    %cst_29 = arith.constant 9.99999974E-6 : f32
    %99 = vector.broadcast %cst_29 : f32 to vector<16x1xf32>
    %100 = arith.addf %98, %99 : vector<16x1xf32>
    %101 = math.rsqrt %100 : vector<16x1xf32>
    %102 = vector.broadcast %101 : vector<16x1xf32> to vector<16x32xf32>
    %103 = arith.mulf %93, %102 : vector<16x32xf32>
    %104 = vector.broadcast %79 : vector<1x32xf32> to vector<16x32xf32>
    %105 = arith.mulf %103, %104 : vector<16x32xf32>
    %106 = vector.broadcast %80 : vector<1x32xf32> to vector<16x32xf32>
    %107 = arith.addf %105, %106 : vector<16x32xf32>
    %108 = arith.truncf %107 : vector<16x32xf32> to vector<16x32xbf16>
    %c0_30 = arith.constant 0 : index
    %c0_31 = arith.constant 0 : index
    %109 = vector.load %arg5[%c0_30, %c0_31] : memref<32x128xbf16, #tpu.memory_space<vmem>>, vector<32x128xbf16>
    %cst_32 = arith.constant dense<0.000000e+00> : vector<16x128xf32>
    %110 = tpu.matmul %108, %109, %cst_32 {dimension_numbers = #tpu.dot_dimension_numbers<[1], [0], [0], [1], [0, 0, 1, 1], [], []>} : vector<16x32xbf16>, vector<32x128xbf16>, vector<16x128xf32> -> vector<16x128xf32>
    %c0_33 = arith.constant 0 : index
    %c0_34 = arith.constant 0 : index
    %111 = vector.load %arg8[%c0_33, %c0_34] : memref<1x128xf32, #tpu.memory_space<vmem>>, vector<1x128xf32>
    %112 = vector.broadcast %111 : vector<1x128xf32> to vector<16x128xf32>
    %113 = arith.addf %110, %112 : vector<16x128xf32>
    %cst_35 = arith.constant 0.000000e+00 : f32
    %114 = vector.broadcast %cst_35 : f32 to vector<16x128xf32>
    %115 = arith.maximumf %113, %114 : vector<16x128xf32>
    %116 = arith.truncf %115 : vector<16x128xf32> to vector<16x128xbf16>
    %c0_36 = arith.constant 0 : index
    %c0_37 = arith.constant 0 : index
    %117 = vector.load %arg6[%c0_36, %c0_37] : memref<128x32xbf16, #tpu.memory_space<vmem>>, vector<128x32xbf16>
    %cst_38 = arith.constant dense<0.000000e+00> : vector<16x32xf32>
    %118 = tpu.matmul %116, %117, %cst_38 {dimension_numbers = #tpu.dot_dimension_numbers<[1], [0], [0], [1], [0, 0, 1, 1], [], []>} : vector<16x128xbf16>, vector<128x32xbf16>, vector<16x32xf32> -> vector<16x32xf32>
    %119 = vector.broadcast %81 : vector<1x32xf32> to vector<16x32xf32>
    %120 = arith.addf %118, %119 : vector<16x32xf32>
    %121 = arith.addf %120, %107 : vector<16x32xf32>
    %cst_39 = arith.constant dense<0.000000e+00> : vector<16xf32>
    %122 = vector.multi_reduction <add>, %121, %cst_39 [1] : vector<16x32xf32> to vector<16xf32>
    %123 = vector.shape_cast %122 : vector<16xf32> to vector<16x1xf32>
    %cst_40 = arith.constant 3.200000e+01 : f32
    %124 = vector.broadcast %cst_40 : f32 to vector<16x1xf32>
    %125 = arith.divf %123, %124 : vector<16x1xf32>
    %126 = vector.broadcast %125 : vector<16x1xf32> to vector<16x32xf32>
    %127 = arith.subf %121, %126 : vector<16x32xf32>
    %128 = arith.mulf %127, %127 : vector<16x32xf32>
    %cst_41 = arith.constant dense<0.000000e+00> : vector<16xf32>
    %129 = vector.multi_reduction <add>, %128, %cst_41 [1] : vector<16x32xf32> to vector<16xf32>
    %130 = vector.shape_cast %129 : vector<16xf32> to vector<16x1xf32>
    %cst_42 = arith.constant 3.200000e+01 : f32
    %131 = vector.broadcast %cst_42 : f32 to vector<16x1xf32>
    %132 = arith.divf %130, %131 : vector<16x1xf32>
    %cst_43 = arith.constant 9.99999974E-6 : f32
    %133 = vector.broadcast %cst_43 : f32 to vector<16x1xf32>
    %134 = arith.addf %132, %133 : vector<16x1xf32>
    %135 = math.rsqrt %134 : vector<16x1xf32>
    %136 = vector.broadcast %135 : vector<16x1xf32> to vector<16x32xf32>
    %137 = arith.mulf %127, %136 : vector<16x32xf32>
    %138 = vector.broadcast %82 : vector<1x32xf32> to vector<16x32xf32>
    %139 = arith.mulf %137, %138 : vector<16x32xf32>
    %140 = vector.broadcast %83 : vector<1x32xf32> to vector<16x32xf32>
    %141 = arith.addf %139, %140 : vector<16x32xf32>
    %c0_44 = arith.constant 0 : index
    %c0_45 = arith.constant 0 : index
    %142 = vector.load %arg9[%c0_44, %c0_45] : memref<16x32xf32, #tpu.memory_space<vmem>>, vector<16x32xf32>
    tpu.vector_store %arg9[%c0_44, %c0_45], %141 {strides = array<i32>} : memref<16x32xf32, #tpu.memory_space<vmem>>, vector<16x32xf32>,
    return
  }
}

</mosaic_0001>

<llo_original>
// kernel: tpu_custom_call.1
$region0: #{tpu_custom_call.1}
  #allocation0 [shape = 'u32[]', space=smem, size = 0x4, offset = 0x4, fixed_abs, tag = 'smem constant byte address 0x4 - core index']
  #allocation1 [shape = 'u32[144,128]{1,0:T(1,128)}', space=vmem, size = 0x12000, scoped, tag = 'internal scratch']
  %s0 = inlined_call_operand.vmem [shape: bf16[128,12], index: 0, kind: input, shape index: {}]
  %s1 = inlined_call_operand.vmem [shape: f32[16,32], index: 1, kind: input, shape index: {}]
  %s2 = inlined_call_operand.vmem [shape: f32[16,8,8], index: 2, kind: input, shape index: {}]
  %s3 = inlined_call_operand.vmem [shape: bf16[12,12], index: 3, kind: input, shape index: {}]
  %s4 = inlined_call_operand.vmem [shape: bf16[32,32], index: 4, kind: input, shape index: {}]
  %s5 = inlined_call_operand.vmem [shape: bf16[32,128], index: 5, kind: input, shape index: {}]
  %s6 = inlined_call_operand.vmem [shape: bf16[128,32], index: 6, kind: input, shape index: {}]
  %s7 = inlined_call_operand.vmem [shape: f32[8,32], index: 7, kind: input, shape index: {}]
  %s8 = inlined_call_operand.vmem [shape: f32[1,128], index: 8, kind: input, shape index: {}]
  %s9 = inlined_call_operand.hbm [shape: f32[16,32], index: 9, kind: output, shape index: {}]
  %s10 = sld [smem:[#allocation0]]
  $region46: #{tpu_custom_call.1} parent=0
    _
  %s12 = ssub.s32 1, %s10
  %s13 = scalar_select 0, %s12, %s10
  $region1: #{tpu_custom_call.1} parent=0
    #allocation2 [shape = 'u8[8192]{0}', space=vmem, size = 0x2000, scoped, tag = 'output window, operand 0, single buffered']
    #allocation3 [shape = 's32[1]{0}', space=sflag, size = 0x4, scoped, tag = 'scoped memory for tpu_custom_call.1']
    %14 = vsyncpa [#allocation3], 0
    // Predicated region
    $region2: #{tpu_custom_call.1} parent=1 // pred_check
      _
    $region3: #{tpu_custom_call.1} parent=1 // pred_check_branch
      %16 = sbr.rel (0) target = $region5
    $region4: #{tpu_custom_call.1} parent=1 // pred_region
      _
    $region5: #{tpu_custom_call.1} parent=1 // pred_fallthru
      _
    // Predicated region
    $region6: #{tpu_custom_call.1} parent=1 // pred_check
      _
    $region7: #{tpu_custom_call.1} parent=1 // pred_check_branch
      %18 = sbr.rel (0) target = $region9
    $region8: #{tpu_custom_call.1} parent=1 // pred_region
      _
    $region9: #{tpu_custom_call.1} parent=1 // pred_fallthru
      _
    // Predicated region
    $region10: #{tpu_custom_call.1} parent=1 // pred_check
      _
    $region11: #{tpu_custom_call.1} parent=1 // pred_check_branch
      %20 = sbr.rel (0) target = $region13
    $region12: #{tpu_custom_call.1} parent=1 // pred_region
      _
    $region13: #{tpu_custom_call.1} parent=1 // pred_fallthru
      _
    // Predicated region
    $region14: #{tpu_custom_call.1} parent=1 // pred_check
      _
    $region15: #{tpu_custom_call.1} parent=1 // pred_check_branch
      %22 = sbr.rel (0) target = $region17
    $region16: #{tpu_custom_call.1} parent=1 // pred_region
      _
    $region17: #{tpu_custom_call.1} parent=1 // pred_fallthru
      _
    // Predicated region
    $region18: #{tpu_custom_call.1} parent=1 // pred_check
      _
    $region19: #{tpu_custom_call.1} parent=1 // pred_check_branch
      %24 = sbr.rel (0) target = $region21
    $region20: #{tpu_custom_call.1} parent=1 // pred_region
      _
    $region21: #{tpu_custom_call.1} parent=1 // pred_fallthru
      _
    // Predicated region
    $region22: #{tpu_custom_call.1} parent=1 // pred_check
      _
    $region23: #{tpu_custom_call.1} parent=1 // pred_check_branch
      %26 = sbr.rel (0) target = $region25
    $region24: #{tpu_custom_call.1} parent=1 // pred_region
      _
    $region25: #{tpu_custom_call.1} parent=1 // pred_fallthru
      _
    // Predicated region
    $region26: #{tpu_custom_call.1} parent=1 // pred_check
      _
    $region27: #{tpu_custom_call.1} parent=1 // pred_check_branch
      %28 = sbr.rel (0) target = $region29
    $region28: #{tpu_custom_call.1} parent=1 // pred_region
      _
    $region29: #{tpu_custom_call.1} parent=1 // pred_fallthru
      _
    // Predicated region
    $region30: #{tpu_custom_call.1} parent=1 // pred_check
      _
    $region31: #{tpu_custom_call.1} parent=1 // pred_check_branch
      %30 = sbr.rel (0) target = $region33
    $region32: #{tpu_custom_call.1} parent=1 // pred_region
      _
    $region33: #{tpu_custom_call.1} parent=1 // pred_fallthru
      _
    // Predicated region
    $region34: #{tpu_custom_call.1} parent=1 // pred_check
      _
    $region35: #{tpu_custom_call.1} parent=1 // pred_check_branch
      %32 = sbr.rel (0) target = $region37
    $region36: #{tpu_custom_call.1} parent=1 // pred_region
      _
    $region37: #{tpu_custom_call.1} parent=1 // pred_fallthru
      _
    %v34 = vld [vmem:[%s0] sm:$0xf]
    %v35 = vld [vmem:[%s0 + $0x4] sm:$0xf]
    %v36 = vld [vmem:[%s0 + $0x8] sm:$0xf]
    %v37 = vld [vmem:[%s0 + $0xc] sm:$0xf]
    %v38 = vld [vmem:[%s0 + $0x10] sm:$0xf]
    %v39 = vld [vmem:[%s0 + $0x14] sm:$0xf]
    %v40 = vld [vmem:[%s0 + $0x18] sm:$0xf]
    %v41 = vld [vmem:[%s0 + $0x1c] sm:$0xf]
    %v42 = vld [vmem:[%s0 + $0x20] sm:$0xf]
    %v43 = vld [vmem:[%s0 + $0x24] sm:$0xf]
    %v44 = vld [vmem:[%s0 + $0x28] sm:$0xf]
    %v45 = vld [vmem:[%s0 + $0x2c] sm:$0xf]
    %v46 = vld [vmem:[%s0 + $0x30] sm:$0xf]
    %v47 = vld [vmem:[%s0 + $0x34] sm:$0xf]
    %v48 = vld [vmem:[%s0 + $0x38] sm:$0xf]
    %v49 = vld [vmem:[%s0 + $0x3c] sm:$0xf]
    %v50 = vld [vmem:[%s3] sm:$0xf]
    %v51 = vld [vmem:[%s3 + $0x4] sm:$0x3]
    %v68 = vunpack.c.l.b16 %v34
    %v69 = vunpack.c.l.b16 %v35
    %v70 = vunpack.c.l.b16 %v36
    %v71 = vunpack.c.l.b16 %v37
    %v72 = vunpack.c.l.b16 %v38
    %v73 = vunpack.c.l.b16 %v39
    %v74 = vunpack.c.l.b16 %v40
    %v75 = vunpack.c.l.b16 %v41
    %v76 = vunpack.c.l.b16 %v42
    %v77 = vunpack.c.l.b16 %v43
    %v78 = vunpack.c.l.b16 %v44
    %v79 = vunpack.c.l.b16 %v45
    %v80 = vunpack.c.l.b16 %v46
    %v81 = vunpack.c.l.b16 %v47
    %v82 = vunpack.c.l.b16 %v48
    %v83 = vunpack.c.l.b16 %v49
    %v84 = vpack.c.b16 %v69, %v68
    %v85 = vpack.c.b16 %v71, %v70
    %v86 = vpack.c.b16 %v73, %v72
    %v87 = vpack.c.b16 %v75, %v74
    %v88 = vpack.c.b16 %v77, %v76
    %v89 = vpack.c.b16 %v79, %v78
    %v90 = vpack.c.b16 %v81, %v80
    %v91 = vpack.c.b16 %v83, %v82
    %v94 = vunpack.c.l.b16 %v50
    %v95 = vunpack.c.l.b16 %v51
    %v96 = vpack.c.b16 %v95, %v94
    %vm97 = vcmask 97280
    %v99 = vsel %vm97, %v84, 0
    %v102 = vsel %vm97, %v85, 0
    %v105 = vsel %vm97, %v86, 0
    %v108 = vsel %vm97, %v87, 0
    %v111 = vsel %vm97, %v88, 0
    %v114 = vsel %vm97, %v89, 0
    %v117 = vsel %vm97, %v90, 0
    %v120 = vsel %vm97, %v91, 0
    %vm122 = vcmask 1045504
    %v124 = vsel %vm122, %v96, 0
    %126 = vmatprep.subr.bf16.mxu0 0
    %127 = vmatpush1.bf16.msra.mxu0 0
    %128 = vmatprep.subr.bf16.mxu0 0
    %129 = vmatpush1.bf16.msra.mxu0 0
    %130 = vmatprep.subr.bf16.mxu0 0
    %131 = vmatpush1.bf16.msra.mxu0 0
    %132 = vmatprep.subr.bf16.mxu0 0
    %133 = vmatpush1.bf16.msra.mxu0 0
    %134 = vmatprep.subr.bf16.mxu0 0
    %135 = vmatpush1.bf16.msra.mxu0 0
    %136 = vmatprep.subr.bf16.mxu0 0
    %137 = vmatpush1.bf16.msra.mxu0 0
    %138 = vmatprep.subr.bf16.mxu0 0
    %139 = vmatpush1.bf16.msra.mxu0 0
    %140 = vmatprep.subr.bf16.mxu0 0
    %141 = vmatpush1.bf16.msra.mxu0 %v124
    %142 = vmatprep.subr.bf16.mxu0 0
    %143 = vmatpush2.bf16.msra.mxu0 0
    %144 = vmatprep.subr.bf16.mxu0 0
    %145 = vmatpush2.bf16.msra.mxu0 0
    %146 = vmatprep.subr.bf16.mxu0 0
    %147 = vmatpush2.bf16.msra.mxu0 0
    %148 = vmatprep.subr.bf16.mxu0 0
    %149 = vmatpush2.bf16.msra.mxu0 0
    %150 = vmatprep.subr.bf16.mxu0 0
    %151 = vmatpush2.bf16.msra.mxu0 0
    %152 = vmatprep.subr.bf16.mxu0 0
    %153 = vmatpush2.bf16.msra.mxu0 0
    %154 = vmatprep.subr.bf16.mxu0 0
    %155 = vmatpush2.bf16.msra.mxu0 0
    %156 = vmatprep.subr.bf16.mxu0 0
    %157 = vmatpush2.bf16.msra.mxu0 0
    %158 = vmatprep.mubr.bf16.mxu0 0
    %159 = vmatmul.mubr.bf16.gmra.mxu0 %v99
    %v160 = vpop.f32.mrf.mxu0
    %v161 = vadd.f32 0.0, %v160
    %v162 = vpop.f32.mrf.mxu0
    %v163 = vpop.f32.mrf.mxu0
    %v164 = vadd.f32 0.0, %v163
    %v165 = vpop.f32.mrf.mxu0
    %166 = vmatprep.mubr.bf16.mxu0 0
    %167 = vmatmul.mubr.bf16.gmra.mxu0 %v102
    %v168 = vpop.f32.mrf.mxu0
    %v169 = vadd.f32 0.0, %v168
    %v170 = vpop.f32.mrf.mxu0
    %v171 = vpop.f32.mrf.mxu0
    %v172 = vadd.f32 0.0, %v171
    %v173 = vpop.f32.mrf.mxu0
    %174 = vmatprep.mubr.bf16.mxu0 0
    %175 = vmatmul.mubr.bf16.gmra.mxu0 %v105
    %v176 = vpop.f32.mrf.mxu0
    %v177 = vadd.f32 0.0, %v176
    %v178 = vpop.f32.mrf.mxu0
    %v179 = vpop.f32.mrf.mxu0
    %v180 = vadd.f32 0.0, %v179
    %v181 = vpop.f32.mrf.mxu0
    %182 = vmatprep.mubr.bf16.mxu0 0
    %183 = vmatmul.mubr.bf16.gmra.mxu0 %v108
    %v184 = vpop.f32.mrf.mxu0
    %v185 = vadd.f32 0.0, %v184
    %v186 = vpop.f32.mrf.mxu0
    %v187 = vpop.f32.mrf.mxu0
    %v188 = vadd.f32 0.0, %v187
    %v189 = vpop.f32.mrf.mxu0
    %190 = vmatprep.mubr.bf16.mxu0 0
    %191 = vmatmul.mubr.bf16.gmra.mxu0 %v111
    %v192 = vpop.f32.mrf.mxu0
    %v193 = vadd.f32 0.0, %v192
    %v194 = vpop.f32.mrf.mxu0
    %v195 = vpop.f32.mrf.mxu0
    %v196 = vadd.f32 0.0, %v195
    %v197 = vpop.f32.mrf.mxu0
    %198 = vmatprep.mubr.bf16.mxu0 0
    %199 = vmatmul.mubr.bf16.gmra.mxu0 %v114
    %v200 = vpop.f32.mrf.mxu0
    %v201 = vadd.f32 0.0, %v200
    %v202 = vpop.f32.mrf.mxu0
    %v203 = vpop.f32.mrf.mxu0
    %v204 = vadd.f32 0.0, %v203
    %v205 = vpop.f32.mrf.mxu0
    %206 = vmatprep.mubr.bf16.mxu0 0
    %207 = vmatmul.mubr.bf16.gmra.mxu0 %v117
    %v208 = vpop.f32.mrf.mxu0
    %v209 = vadd.f32 0.0, %v208
    %v210 = vpop.f32.mrf.mxu0
    %v211 = vpop.f32.mrf.mxu0
    %v212 = vadd.f32 0.0, %v211
    %v213 = vpop.f32.mrf.mxu0
    %214 = vmatprep.mubr.bf16.mxu0 0
    %215 = vmatmul.mubr.bf16.gmra.mxu0 %v120
    %v216 = vpop.f32.mrf.mxu0
    %v217 = vadd.f32 0.0, %v216
    %v218 = vpop.f32.mrf.mxu0
    %v219 = vpop.f32.mrf.mxu0
    %v220 = vadd.f32 0.0, %v219
    %v221 = vpop.f32.mrf.mxu0
    %222 = vdwg.mxu0
    %v223 = vpack.c.bf16 %v164, %v161
    %v224 = vpack.c.bf16 %v172, %v169
    %v225 = vpack.c.bf16 %v180, %v177
    %v226 = vpack.c.bf16 %v188, %v185
    %v227 = vpack.c.bf16 %v196, %v193
    %v228 = vpack.c.bf16 %v204, %v201
    %v229 = vpack.c.bf16 %v212, %v209
    %v230 = vpack.c.bf16 %v220, %v217
    %v239 = vunpack.c.l.b16 %v223
    %v240 = vunpack.c.h.b16 %v223
    %v241 = vunpack.c.l.b16 %v224
    %v242 = vunpack.c.h.b16 %v224
    %v243 = vunpack.c.l.b16 %v225
    %v244 = vunpack.c.h.b16 %v225
    %v245 = vunpack.c.l.b16 %v226
    %v246 = vunpack.c.h.b16 %v226
    %v247 = vunpack.c.l.b16 %v227
    %v248 = vunpack.c.h.b16 %v227
    %v249 = vunpack.c.l.b16 %v228
    %v250 = vunpack.c.h.b16 %v228
    %v251 = vunpack.c.l.b16 %v229
    %v252 = vunpack.c.h.b16 %v229
    %v253 = vunpack.c.l.b16 %v230
    %v254 = vunpack.c.h.b16 %v230
    %v255 = vpack.c.b16 %v239, %v239
    %v256 = vpack.c.b16 %v240, %v240
    %v257 = vpack.c.b16 %v241, %v241
    %v258 = vpack.c.b16 %v242, %v242
    %v259 = vpack.c.b16 %v243, %v243
    %v260 = vpack.c.b16 %v244, %v244
    %v261 = vpack.c.b16 %v245, %v245
    %v262 = vpack.c.b16 %v246, %v246
    %v263 = vpack.c.b16 %v247, %v247
    %v264 = vpack.c.b16 %v248, %v248
    %v265 = vpack.c.b16 %v249, %v249
    %v266 = vpack.c.b16 %v250, %v250
    %v267 = vpack.c.b16 %v251, %v251
    %v268 = vpack.c.b16 %v252, %v252
    %v269 = vpack.c.b16 %v253, %v253
    %v270 = vpack.c.b16 %v254, %v254
    %v271 = vld [vmem:[%s2] sm:$0xff]
    %v272 = vld [vmem:[%s2 + $0x8] sm:$0xff]
    %v273 = vld [vmem:[%s2 + $0x10] sm:$0xff]
    %v274 = vld [vmem:[%s2 + $0x18] sm:$0xff]
    %v275 = vld [vmem:[%s2 + $0x20] sm:$0xff]
    %v276 = vld [vmem:[%s2 + $0x28] sm:$0xff]
    %v277 = vld [vmem:[%s2 + $0x30] sm:$0xff]
    %v278 = vld [vmem:[%s2 + $0x38] sm:$0xff]
    %v279 = vld [vmem:[%s2 + $0x40] sm:$0xff]
    %v280 = vld [vmem:[%s2 + $0x48] sm:$0xff]
    %v281 = vld [vmem:[%s2 + $0x50] sm:$0xff]
    %v282 = vld [vmem:[%s2 + $0x58] sm:$0xff]
    %v283 = vld [vmem:[%s2 + $0x60] sm:$0xff]
    %v284 = vld [vmem:[%s2 + $0x68] sm:$0xff]
    %v285 = vld [vmem:[%s2 + $0x70] sm:$0xff]
    %v286 = vld [vmem:[%s2 + $0x78] sm:$0xff]
    %287 = vrot.lane.b32.xlu0 %v255, 124
    %v288 = vpop.permute.xlu0 %287
    %vm289 = vcmask 31744
    %v291 = vsel %vm289, %v255, 0
    %v294 = vsel %vm289, %v288, 0
    %296 = vmatprep.subr.bf16.mxu0 0
    %297 = vmatpush1.bf16.xpose.msra.mxu0 0
    %298 = vmatprep.subr.bf16.mxu0 0
    %299 = vmatpush1.bf16.xpose.msra.mxu0 0
    %300 = vmatprep.subr.bf16.mxu0 0
    %301 = vmatpush1.bf16.xpose.msra.mxu0 0
    %302 = vmatprep.subr.bf16.mxu0 0
    %303 = vmatpush1.bf16.xpose.msra.mxu0 0
    %304 = vmatprep.subr.bf16.mxu0 0
    %305 = vmatpush1.bf16.xpose.msra.mxu0 0
    %306 = vmatprep.subr.bf16.mxu0 0
    %307 = vmatpush1.bf16.xpose.msra.mxu0 0
    %308 = vmatprep.subr.bf16.mxu0 0
    %309 = vmatpush1.bf16.xpose.msra.mxu0 0
    %310 = vmatprep.subr.bf16.mxu0 0
    %311 = vmatpush1.bf16.xpose.msra.mxu0 %v294
    %312 = vmatprep.subr.bf16.mxu0 0
    %313 = vmatpush2.bf16.xpose.msra.mxu0 0
    %314 = vmatprep.subr.bf16.mxu0 0
    %315 = vmatpush2.bf16.xpose.msra.mxu0 0
    %316 = vmatprep.subr.bf16.mxu0 0
    %317 = vmatpush2.bf16.xpose.msra.mxu0 0
    %318 = vmatprep.subr.bf16.mxu0 0
    %319 = vmatpush2.bf16.xpose.msra.mxu0 0
    %320 = vmatprep.subr.bf16.mxu0 0
    %321 = vmatpush2.bf16.xpose.msra.mxu0 0
    %322 = vmatprep.subr.bf16.mxu0 0
    %323 = vmatpush2.bf16.xpose.msra.mxu0 0
    %324 = vmatprep.subr.bf16.mxu0 0
    %325 = vmatpush2.bf16.xpose.msra.mxu0 0
    %326 = vmatprep.subr.bf16.mxu0 0
    %327 = vmatpush2.bf16.xpose.msra.mxu0 0
    %328 = vmatprep.mubr.bf16.mxu0 0
    %329 = vmatmul.mubr.bf16.gmra.mxu0 %v291
    %v330 = vpop.f32.mrf.mxu0
    %v331 = vadd.f32 %v271, %v330
    %v332 = vpop.f32.mrf.mxu0
    %v333 = vpop.f32.mrf.mxu0
    %v334 = vpop.f32.mrf.mxu0
    %335 = vdwg.mxu0
    %336 = vrot.lane.b32.xlu0 %v256, 124
    %v337 = vpop.permute.xlu0 %336
    %v339 = vsel %vm289, %v256, 0
    %v342 = vsel %vm289, %v337, 0
    %344 = vmatprep.subr.bf16.mxu0 0
    %345 = vmatpush1.bf16.xpose.msra.mxu0 0
    %346 = vmatprep.subr.bf16.mxu0 0
    %347 = vmatpush1.bf16.xpose.msra.mxu0 0
    %348 = vmatprep.subr.bf16.mxu0 0
    %349 = vmatpush1.bf16.xpose.msra.mxu0 0
    %350 = vmatprep.subr.bf16.mxu0 0
    %351 = vmatpush1.bf16.xpose.msra.mxu0 0
    %352 = vmatprep.subr.bf16.mxu0 0
    %353 = vmatpush1.bf16.xpose.msra.mxu0 0
    %354 = vmatprep.subr.bf16.mxu0 0
    %355 = vmatpush1.bf16.xpose.msra.mxu0 0
    %356 = vmatprep.subr.bf16.mxu0 0
    %357 = vmatpush1.bf16.xpose.msra.mxu0 0
    %358 = vmatprep.subr.bf16.mxu0 0
    %359 = vmatpush1.bf16.xpose.msra.mxu0 %v342
    %360 = vmatprep.subr.bf16.mxu0 0
    %361 = vmatpush2.bf16.xpose.msra.mxu0 0
    %362 = vmatprep.subr.bf16.mxu0 0
    %363 = vmatpush2.bf16.xpose.msra.mxu0 0
    %364 = vmatprep.subr.bf16.mxu0 0
    %365 = vmatpush2.bf16.xpose.msra.mxu0 0
    %366 = vmatprep.subr.bf16.mxu0 0
    %367 = vmatpush2.bf16.xpose.msra.mxu0 0
    %368 = vmatprep.subr.bf16.mxu0 0
    %369 = vmatpush2.bf16.xpose.msra.mxu0 0
    %370 = vmatprep.subr.bf16.mxu0 0
    %371 = vmatpush2.bf16.xpose.msra.mxu0 0
    %372 = vmatprep.subr.bf16.mxu0 0
    %373 = vmatpush2.bf16.xpose.msra.mxu0 0
    %374 = vmatprep.subr.bf16.mxu0 0
    %375 = vmatpush2.bf16.xpose.msra.mxu0 0
    %376 = vmatprep.mubr.bf16.mxu0 0
    %377 = vmatmul.mubr.bf16.gmra.mxu0 %v339
    %v378 = vpop.f32.mrf.mxu0
    %v379 = vadd.f32 %v272, %v378
    %v380 = vpop.f32.mrf.mxu0
    %v381 = vpop.f32.mrf.mxu0
    %v382 = vpop.f32.mrf.mxu0
    %383 = vdwg.mxu0
    %384 = vrot.lane.b32.xlu0 %v257, 124
    %v385 = vpop.permute.xlu0 %384
    %v387 = vsel %vm289, %v257, 0
    %v390 = vsel %vm289, %v385, 0
    %392 = vmatprep.subr.bf16.mxu0 0
    %393 = vmatpush1.bf16.xpose.msra.mxu0 0
    %394 = vmatprep.subr.bf16.mxu0 0
    %395 = vmatpush1.bf16.xpose.msra.mxu0 0
    %396 = vmatprep.subr.bf16.mxu0 0
    %397 = vmatpush1.bf16.xpose.msra.mxu0 0
    %398 = vmatprep.subr.bf16.mxu0 0
    %399 = vmatpush1.bf16.xpose.msra.mxu0 0
    %400 = vmatprep.subr.bf16.mxu0 0
    %401 = vmatpush1.bf16.xpose.msra.mxu0 0
    %402 = vmatprep.subr.bf16.mxu0 0
    %403 = vmatpush1.bf16.xpose.msra.mxu0 0
    %404 = vmatprep.subr.bf16.mxu0 0
    %405 = vmatpush1.bf16.xpose.msra.mxu0 0
    %406 = vmatprep.subr.bf16.mxu0 0
    %407 = vmatpush1.bf16.xpose.msra.mxu0 %v390
    %408 = vmatprep.subr.bf16.mxu0 0
    %409 = vmatpush2.bf16.xpose.msra.mxu0 0
    %410 = vmatprep.subr.bf16.mxu0 0
    %411 = vmatpush2.bf16.xpose.msra.mxu0 0
    %412 = vmatprep.subr.bf16.mxu0 0
    %413 = vmatpush2.bf16.xpose.msra.mxu0 0
    %414 = vmatprep.subr.bf16.mxu0 0
    %415 = vmatpush2.bf16.xpose.msra.mxu0 0
    %416 = vmatprep.subr.bf16.mxu0 0
    %417 = vmatpush2.bf16.xpose.msra.mxu0 0
    %418 = vmatprep.subr.bf16.mxu0 0
    %419 = vmatpush2.bf16.xpose.msra.mxu0 0
    %420 = vmatprep.subr.bf16.mxu0 0
    %421 = vmatpush2.bf16.xpose.msra.mxu0 0
    %422 = vmatprep.subr.bf16.mxu0 0
    %423 = vmatpush2.bf16.xpose.msra.mxu0 0
    %424 = vmatprep.mubr.bf16.mxu0 0
    %425 = vmatmul.mubr.bf16.gmra.mxu0 %v387
    %v426 = vpop.f32.mrf.mxu0
    %v427 = vadd.f32 %v273, %v426
    %v428 = vpop.f32.mrf.mxu0
    %v429 = vpop.f32.mrf.mxu0
    %v430 = vpop.f32.mrf.mxu0
    %431 = vdwg.mxu0
    %432 = vrot.lane.b32.xlu0 %v258, 124
    %v433 = vpop.permute.xlu0 %432
    %v435 = vsel %vm289, %v258, 0
    %v438 = vsel %vm289, %v433, 0
    %440 = vmatprep.subr.bf16.mxu0 0
    %441 = vmatpush1.bf16.xpose.msra.mxu0 0
    %442 = vmatprep.subr.bf16.mxu0 0
    %443 = vmatpush1.bf16.xpose.msra.mxu0 0
    %444 = vmatprep.subr.bf16.mxu0 0
    %445 = vmatpush1.bf16.xpose.msra.mxu0 0
    %446 = vmatprep.subr.bf16.mxu0 0
    %447 = vmatpush1.bf16.xpose.msra.mxu0 0
    %448 = vmatprep.subr.bf16.mxu0 0
    %449 = vmatpush1.bf16.xpose.msra.mxu0 0
    %450 = vmatprep.subr.bf16.mxu0 0
    %451 = vmatpush1.bf16.xpose.msra.mxu0 0
    %452 = vmatprep.subr.bf16.mxu0 0
    %453 = vmatpush1.bf16.xpose.msra.mxu0 0
    %454 = vmatprep.subr.bf16.mxu0 0
    %455 = vmatpush1.bf16.xpose.msra.mxu0 %v438
    %456 = vmatprep.subr.bf16.mxu0 0
    %457 = vmatpush2.bf16.xpose.msra.mxu0 0
    %458 = vmatprep.subr.bf16.mxu0 0
    %459 = vmatpush2.bf16.xpose.msra.mxu0 0
    %460 = vmatprep.subr.bf16.mxu0 0
    %461 = vmatpush2.bf16.xpose.msra.mxu0 0
    %462 = vmatprep.subr.bf16.mxu0 0
    %463 = vmatpush2.bf16.xpose.msra.mxu0 0
    %464 = vmatprep.subr.bf16.mxu0 0
    %465 = vmatpush2.bf16.xpose.msra.mxu0 0
    %466 = vmatprep.subr.bf16.mxu0 0
    %467 = vmatpush2.bf16.xpose.msra.mxu0 0
    %468 = vmatprep.subr.bf16.mxu0 0
    %469 = vmatpush2.bf16.xpose.msra.mxu0 0
    %470 = vmatprep.subr.bf16.mxu0 0
    %471 = vmatpush2.bf16.xpose.msra.mxu0 0
    %472 = vmatprep.mubr.bf16.mxu0 0
    %473 = vmatmul.mubr.bf16.gmra.mxu0 %v435
    %v474 = vpop.f32.mrf.mxu0
    %v475 = vadd.f32 %v274, %v474
    %v476 = vpop.f32.mrf.mxu0
    %v477 = vpop.f32.mrf.mxu0
    %v478 = vpop.f32.mrf.mxu0
    %479 = vdwg.mxu0
    %480 = vrot.lane.b32.xlu0 %v259, 124
    %v481 = vpop.permute.xlu0 %480
    %v483 = vsel %vm289, %v259, 0
    %v486 = vsel %vm289, %v481, 0
    %488 = vmatprep.subr.bf16.mxu0 0
    %489 = vmatpush1.bf16.xpose.msra.mxu0 0
    %490 = vmatprep.subr.bf16.mxu0 0
    %491 = vmatpush1.bf16.xpose.msra.mxu0 0
    %492 = vmatprep.subr.bf16.mxu0 0
    %493 = vmatpush1.bf16.xpose.msra.mxu0 0
    %494 = vmatprep.subr.bf16.mxu0 0
    %495 = vmatpush1.bf16.xpose.msra.mxu0 0
    %496 = vmatprep.subr.bf16.mxu0 0
    %497 = vmatpush1.bf16.xpose.msra.mxu0 0
    %498 = vmatprep.subr.bf16.mxu0 0
    %499 = vmatpush1.bf16.xpose.msra.mxu0 0
    %500 = vmatprep.subr.bf16.mxu0 0
    %501 = vmatpush1.bf16.xpose.msra.mxu0 0
    %502 = vmatprep.subr.bf16.mxu0 0
    %503 = vmatpush1.bf16.xpose.msra.mxu0 %v486
    %504 = vmatprep.subr.bf16.mxu0 0
    %505 = vmatpush2.bf16.xpose.msra.mxu0 0
    %506 = vmatprep.subr.bf16.mxu0 0
    %507 = vmatpush2.bf16.xpose.msra.mxu0 0
    %508 = vmatprep.subr.bf16.mxu0 0
    %509 = vmatpush2.bf16.xpose.msra.mxu0 0
    %510 = vmatprep.subr.bf16.mxu0 0
    %511 = vmatpush2.bf16.xpose.msra.mxu0 0
    %512 = vmatprep.subr.bf16.mxu0 0
    %513 = vmatpush2.bf16.xpose.msra.mxu0 0
    %514 = vmatprep.subr.bf16.mxu0 0
    %515 = vmatpush2.bf16.xpose.msra.mxu0 0
    %516 = vmatprep.subr.bf16.mxu0 0
    %517 = vmatpush2.bf16.xpose.msra.mxu0 0
    %518 = vmatprep.subr.bf16.mxu0 0
    %519 = vmatpush2.bf16.xpose.msra.mxu0 0
    %520 = vmatprep.mubr.bf16.mxu0 0
    %521 = vmatmul.mubr.bf16.gmra.mxu0 %v483
    %v522 = vpop.f32.mrf.mxu0
    %v523 = vadd.f32 %v275, %v522
    %v524 = vpop.f32.mrf.mxu0
    %v525 = vpop.f32.mrf.mxu0
    %v526 = vpop.f32.mrf.mxu0
    %527 = vdwg.mxu0
    %528 = vrot.lane.b32.xlu0 %v260, 124
    %v529 = vpop.permute.xlu0 %528
    %v531 = vsel %vm289, %v260, 0
    %v534 = vsel %vm289, %v529, 0
    %536 = vmatprep.subr.bf16.mxu0 0
    %537 = vmatpush1.bf16.xpose.msra.mxu0 0
    %538 = vmatprep.subr.bf16.mxu0 0
    %539 = vmatpush1.bf16.xpose.msra.mxu0 0
    %540 = vmatprep.subr.bf16.mxu0 0
    %541 = vmatpush1.bf16.xpose.msra.mxu0 0
    %542 = vmatprep.subr.bf16.mxu0 0
    %543 = vmatpush1.bf16.xpose.msra.mxu0 0
    %544 = vmatprep.subr.bf16.mxu0 0
    %545 = vmatpush1.bf16.xpose.msra.mxu0 0
    %546 = vmatprep.subr.bf16.mxu0 0
    %547 = vmatpush1.bf16.xpose.msra.mxu0 0
    %548 = vmatprep.subr.bf16.mxu0 0
    %549 = vmatpush1.bf16.xpose.msra.mxu0 0
    %550 = vmatprep.subr.bf16.mxu0 0
    %551 = vmatpush1.bf16.xpose.msra.mxu0 %v534
    %552 = vmatprep.subr.bf16.mxu0 0
    %553 = vmatpush2.bf16.xpose.msra.mxu0 0
    %554 = vmatprep.subr.bf16.mxu0 0
    %555 = vmatpush2.bf16.xpose.msra.mxu0 0
    %556 = vmatprep.subr.bf16.mxu0 0
    %557 = vmatpush2.bf16.xpose.msra.mxu0 0
    %558 = vmatprep.subr.bf16.mxu0 0
    %559 = vmatpush2.bf16.xpose.msra.mxu0 0
    %560 = vmatprep.subr.bf16.mxu0 0
    %561 = vmatpush2.bf16.xpose.msra.mxu0 0
    %562 = vmatprep.subr.bf16.mxu0 0
    %563 = vmatpush2.bf16.xpose.msra.mxu0 0
    %564 = vmatprep.subr.bf16.mxu0 0
    %565 = vmatpush2.bf16.xpose.msra.mxu0 0
    %566 = vmatprep.subr.bf16.mxu0 0
    %567 = vmatpush2.bf16.xpose.msra.mxu0 0
    %568 = vmatprep.mubr.bf16.mxu0 0
    %569 = vmatmul.mubr.bf16.gmra.mxu0 %v531
    %v570 = vpop.f32.mrf.mxu0
    %v571 = vadd.f32 %v276, %v570
    %v572 = vpop.f32.mrf.mxu0
    %v573 = vpop.f32.mrf.mxu0
    %v574 = vpop.f32.mrf.mxu0
    %575 = vdwg.mxu0
    %576 = vrot.lane.b32.xlu0 %v261, 124
    %v577 = vpop.permute.xlu0 %576
    %v579 = vsel %vm289, %v261, 0
    %v582 = vsel %vm289, %v577, 0
    %584 = vmatprep.subr.bf16.mxu0 0
    %585 = vmatpush1.bf16.xpose.msra.mxu0 0
    %586 = vmatprep.subr.bf16.mxu0 0
    %587 = vmatpush1.bf16.xpose.msra.mxu0 0
    %588 = vmatprep.subr.bf16.mxu0 0
    %589 = vmatpush1.bf16.xpose.msra.mxu0 0
    %590 = vmatprep.subr.bf16.mxu0 0
    %591 = vmatpush1.bf16.xpose.msra.mxu0 0
    %592 = vmatprep.subr.bf16.mxu0 0
    %593 = vmatpush1.bf16.xpose.msra.mxu0 0
    %594 = vmatprep.subr.bf16.mxu0 0
    %595 = vmatpush1.bf16.xpose.msra.mxu0 0
    %596 = vmatprep.subr.bf16.mxu0 0
    %597 = vmatpush1.bf16.xpose.msra.mxu0 0
    %598 = vmatprep.subr.bf16.mxu0 0
    %599 = vmatpush1.bf16.xpose.msra.mxu0 %v582
    %600 = vmatprep.subr.bf16.mxu0 0
    %601 = vmatpush2.bf16.xpose.msra.mxu0 0
    %602 = vmatprep.subr.bf16.mxu0 0
    %603 = vmatpush2.bf16.xpose.msra.mxu0 0
    %604 = vmatprep.subr.bf16.mxu0 0
    %605 = vmatpush2.bf16.xpose.msra.mxu0 0
    %606 = vmatprep.subr.bf16.mxu0 0
    %607 = vmatpush2.bf16.xpose.msra.mxu0 0
    %608 = vmatprep.subr.bf16.mxu0 0
    %609 = vmatpush2.bf16.xpose.msra.mxu0 0
    %610 = vmatprep.subr.bf16.mxu0 0
    %611 = vmatpush2.bf16.xpose.msra.mxu0 0
    %612 = vmatprep.subr.bf16.mxu0 0
    %613 = vmatpush2.bf16.xpose.msra.mxu0 0
    %614 = vmatprep.subr.bf16.mxu0 0
    %615 = vmatpush2.bf16.xpose.msra.mxu0 0
    %616 = vmatprep.mubr.bf16.mxu0 0
    %617 = vmatmul.mubr.bf16.gmra.mxu0 %v579
    %v618 = vpop.f32.mrf.mxu0
    %v619 = vadd.f32 %v277, %v618
    %v620 = vpop.f32.mrf.mxu0
    %v621 = vpop.f32.mrf.mxu0
    %v622 = vpop.f32.mrf.mxu0
    %623 = vdwg.mxu0
    %624 = vrot.lane.b32.xlu0 %v262, 124
    %v625 = vpop.permute.xlu0 %624
    %v627 = vsel %vm289, %v262, 0
    %v630 = vsel %vm289, %v625, 0
    %632 = vmatprep.subr.bf16.mxu0 0
    %633 = vmatpush1.bf16.xpose.msra.mxu0 0
    %634 = vmatprep.subr.bf16.mxu0 0
    %635 = vmatpush1.bf16.xpose.msra.mxu0 0
    %636 = vmatprep.subr.bf16.mxu0 0
    %637 = vmatpush1.bf16.xpose.msra.mxu0 0
    %638 = vmatprep.subr.bf16.mxu0 0
    %639 = vmatpush1.bf16.xpose.msra.mxu0 0
    %640 = vmatprep.subr.bf16.mxu0 0
    %641 = vmatpush1.bf16.xpose.msra.mxu0 0
    %642 = vmatprep.subr.bf16.mxu0 0
    %643 = vmatpush1.bf16.xpose.msra.mxu0 0
    %644 = vmatprep.subr.bf16.mxu0 0
    %645 = vmatpush1.bf16.xpose.msra.mxu0 0
    %646 = vmatprep.subr.bf16.mxu0 0
    %647 = vmatpush1.bf16.xpose.msra.mxu0 %v630
    %648 = vmatprep.subr.bf16.mxu0 0
    %649 = vmatpush2.bf16.xpose.msra.mxu0 0
    %650 = vmatprep.subr.bf16.mxu0 0
    %651 = vmatpush2.bf16.xpose.msra.mxu0 0
    %652 = vmatprep.subr.bf16.mxu0 0
    %653 = vmatpush2.bf16.xpose.msra.mxu0 0
    %654 = vmatprep.subr.bf16.mxu0 0
    %655 = vmatpush2.bf16.xpose.msra.mxu0 0
    %656 = vmatprep.subr.bf16.mxu0 0
    %657 = vmatpush2.bf16.xpose.msra.mxu0 0
    %658 = vmatprep.subr.bf16.mxu0 0
    %659 = vmatpush2.bf16.xpose.msra.mxu0 0
    %660 = vmatprep.subr.bf16.mxu0 0
    %661 = vmatpush2.bf16.xpose.msra.mxu0 0
    %662 = vmatprep.subr.bf16.mxu0 0
    %663 = vmatpush2.bf16.xpose.msra.mxu0 0
    %664 = vmatprep.mubr.bf16.mxu0 0
    %665 = vmatmul.mubr.bf16.gmra.mxu0 %v627
    %v666 = vpop.f32.mrf.mxu0
    %v667 = vadd.f32 %v278, %v666
    %v668 = vpop.f32.mrf.mxu0
    %v669 = vpop.f32.mrf.mxu0
    %v670 = vpop.f32.mrf.mxu0
    %671 = vdwg.mxu0
    %672 = vrot.lane.b32.xlu0 %v263, 124
    %v673 = vpop.permute.xlu0 %672
    %v675 = vsel %vm289, %v263, 0
    %v678 = vsel %vm289, %v673, 0
    %680 = vmatprep.subr.bf16.mxu0 0
    %681 = vmatpush1.bf16.xpose.msra.mxu0 0
    %682 = vmatprep.subr.bf16.mxu0 0
    %683 = vmatpush1.bf16.xpose.msra.mxu0 0
    %684 = vmatprep.subr.bf16.mxu0 0
    %685 = vmatpush1.bf16.xpose.msra.mxu0 0
    %686 = vmatprep.subr.bf16.mxu0 0
    %687 = vmatpush1.bf16.xpose.msra.mxu0 0
    %688 = vmatprep.subr.bf16.mxu0 0
    %689 = vmatpush1.bf16.xpose.msra.mxu0 0
    %690 = vmatprep.subr.bf16.mxu0 0
    %691 = vmatpush1.bf16.xpose.msra.mxu0 0
    %692 = vmatprep.subr.bf16.mxu0 0
    %693 = vmatpush1.bf16.xpose.msra.mxu0 0
    %694 = vmatprep.subr.bf16.mxu0 0
    %695 = vmatpush1.bf16.xpose.msra.mxu0 %v678
    %696 = vmatprep.subr.bf16.mxu0 0
    %697 = vmatpush2.bf16.xpose.msra.mxu0 0
    %698 = vmatprep.subr.bf16.mxu0 0
    %699 = vmatpush2.bf16.xpose.msra.mxu0 0
    %700 = vmatprep.subr.bf16.mxu0 0
    %701 = vmatpush2.bf16.xpose.msra.mxu0 0
    %702 = vmatprep.subr.bf16.mxu0 0
    %703 = vmatpush2.bf16.xpose.msra.mxu0 0
    %704 = vmatprep.subr.bf16.mxu0 0
    %705 = vmatpush2.bf16.xpose.msra.mxu0 0
    %706 = vmatprep.subr.bf16.mxu0 0
    %707 = vmatpush2.bf16.xpose.msra.mxu0 0
    %708 = vmatprep.subr.bf16.mxu0 0
    %709 = vmatpush2.bf16.xpose.msra.mxu0 0
    %710 = vmatprep.subr.bf16.mxu0 0
    %711 = vmatpush2.bf16.xpose.msra.mxu0 0
    %712 = vmatprep.mubr.bf16.mxu0 0
    %713 = vmatmul.mubr.bf16.gmra.mxu0 %v675
    %v714 = vpop.f32.mrf.mxu0
    %v715 = vadd.f32 %v279, %v714
    %v716 = vpop.f32.mrf.mxu0
    %v717 = vpop.f32.mrf.mxu0
    %v718 = vpop.f32.mrf.mxu0
    %719 = vdwg.mxu0
    %720 = vrot.lane.b32.xlu0 %v264, 124
    %v721 = vpop.permute.xlu0 %720
    %v723 = vsel %vm289, %v264, 0
    %v726 = vsel %vm289, %v721, 0
    %728 = vmatprep.subr.bf16.mxu0 0
    %729 = vmatpush1.bf16.xpose.msra.mxu0 0
    %730 = vmatprep.subr.bf16.mxu0 0
    %731 = vmatpush1.bf16.xpose.msra.mxu0 0
    %732 = vmatprep.subr.bf16.mxu0 0
    %733 = vmatpush1.bf16.xpose.msra.mxu0 0
    %734 = vmatprep.subr.bf16.mxu0 0
    %735 = vmatpush1.bf16.xpose.msra.mxu0 0
    %736 = vmatprep.subr.bf16.mxu0 0
    %737 = vmatpush1.bf16.xpose.msra.mxu0 0
    %738 = vmatprep.subr.bf16.mxu0 0
    %739 = vmatpush1.bf16.xpose.msra.mxu0 0
    %740 = vmatprep.subr.bf16.mxu0 0
    %741 = vmatpush1.bf16.xpose.msra.mxu0 0
    %742 = vmatprep.subr.bf16.mxu0 0
    %743 = vmatpush1.bf16.xpose.msra.mxu0 %v726
    %744 = vmatprep.subr.bf16.mxu0 0
    %745 = vmatpush2.bf16.xpose.msra.mxu0 0
    %746 = vmatprep.subr.bf16.mxu0 0
    %747 = vmatpush2.bf16.xpose.msra.mxu0 0
    %748 = vmatprep.subr.bf16.mxu0 0
    %749 = vmatpush2.bf16.xpose.msra.mxu0 0
    %750 = vmatprep.subr.bf16.mxu0 0
    %751 = vmatpush2.bf16.xpose.msra.mxu0 0
    %752 = vmatprep.subr.bf16.mxu0 0
    %753 = vmatpush2.bf16.xpose.msra.mxu0 0
    %754 = vmatprep.subr.bf16.mxu0 0
    %755 = vmatpush2.bf16.xpose.msra.mxu0 0
    %756 = vmatprep.subr.bf16.mxu0 0
    %757 = vmatpush2.bf16.xpose.msra.mxu0 0
    %758 = vmatprep.subr.bf16.mxu0 0
    %759 = vmatpush2.bf16.xpose.msra.mxu0 0
    %760 = vmatprep.mubr.bf16.mxu0 0
    %761 = vmatmul.mubr.bf16.gmra.mxu0 %v723
    %v762 = vpop.f32.mrf.mxu0
    %v763 = vadd.f32 %v280, %v762
    %v764 = vpop.f32.mrf.mxu0
    %v765 = vpop.f32.mrf.mxu0
    %v766 = vpop.f32.mrf.mxu0
    %767 = vdwg.mxu0
    %768 = vrot.lane.b32.xlu0 %v265, 124
    %v769 = vpop.permute.xlu0 %768
    %v771 = vsel %vm289, %v265, 0
    %v774 = vsel %vm289, %v769, 0
    %776 = vmatprep.subr.bf16.mxu0 0
    %777 = vmatpush1.bf16.xpose.msra.mxu0 0
    %778 = vmatprep.subr.bf16.mxu0 0
    %779 = vmatpush1.bf16.xpose.msra.mxu0 0
    %780 = vmatprep.subr.bf16.mxu0 0
    %781 = vmatpush1.bf16.xpose.msra.mxu0 0
    %782 = vmatprep.subr.bf16.mxu0 0
    %783 = vmatpush1.bf16.xpose.msra.mxu0 0
    %784 = vmatprep.subr.bf16.mxu0 0
    %785 = vmatpush1.bf16.xpose.msra.mxu0 0
    %786 = vmatprep.subr.bf16.mxu0 0
    %787 = vmatpush1.bf16.xpose.msra.mxu0 0
    %788 = vmatprep.subr.bf16.mxu0 0
    %789 = vmatpush1.bf16.xpose.msra.mxu0 0
    %790 = vmatprep.subr.bf16.mxu0 0
    %791 = vmatpush1.bf16.xpose.msra.mxu0 %v774
    %792 = vmatprep.subr.bf16.mxu0 0
    %793 = vmatpush2.bf16.xpose.msra.mxu0 0
    %794 = vmatprep.subr.bf16.mxu0 0
    %795 = vmatpush2.bf16.xpose.msra.mxu0 0
    %796 = vmatprep.subr.bf16.mxu0 0
    %797 = vmatpush2.bf16.xpose.msra.mxu0 0
    %798 = vmatprep.subr.bf16.mxu0 0
    %799 = vmatpush2.bf16.xpose.msra.mxu0 0
    %800 = vmatprep.subr.bf16.mxu0 0
    %801 = vmatpush2.bf16.xpose.msra.mxu0 0
    %802 = vmatprep.subr.bf16.mxu0 0
    %803 = vmatpush2.bf16.xpose.msra.mxu0 0
    %804 = vmatprep.subr.bf16.mxu0 0
    %805 = vmatpush2.bf16.xpose.msra.mxu0 0
    %806 = vmatprep.subr.bf16.mxu0 0
    %807 = vmatpush2.bf16.xpose.msra.mxu0 0
    %808 = vmatprep.mubr.bf16.mxu0 0
    %809 = vmatmul.mubr.bf16.gmra.mxu0 %v771
    %v810 = vpop.f32.mrf.mxu0
    %v811 = vadd.f32 %v281, %v810
    %v812 = vpop.f32.mrf.mxu0
    %v813 = vpop.f32.mrf.mxu0
    %v814 = vpop.f32.mrf.mxu0
    %815 = vdwg.mxu0
    %816 = vrot.lane.b32.xlu0 %v266, 124
    %v817 = vpop.permute.xlu0 %816
    %v819 = vsel %vm289, %v266, 0
    %v822 = vsel %vm289, %v817, 0
    %824 = vmatprep.subr.bf16.mxu0 0
    %825 = vmatpush1.bf16.xpose.msra.mxu0 0
    %826 = vmatprep.subr.bf16.mxu0 0
    %827 = vmatpush1.bf16.xpose.msra.mxu0 0
    %828 = vmatprep.subr.bf16.mxu0 0
    %829 = vmatpush1.bf16.xpose.msra.mxu0 0
    %830 = vmatprep.subr.bf16.mxu0 0
    %831 = vmatpush1.bf16.xpose.msra.mxu0 0
    %832 = vmatprep.subr.bf16.mxu0 0
    %833 = vmatpush1.bf16.xpose.msra.mxu0 0
    %834 = vmatprep.subr.bf16.mxu0 0
    %835 = vmatpush1.bf16.xpose.msra.mxu0 0
    %836 = vmatprep.subr.bf16.mxu0 0
    %837 = vmatpush1.bf16.xpose.msra.mxu0 0
    %838 = vmatprep.subr.bf16.mxu0 0
    %839 = vmatpush1.bf16.xpose.msra.mxu0 %v822
    %840 = vmatprep.subr.bf16.mxu0 0
    %841 = vmatpush2.bf16.xpose.msra.mxu0 0
    %842 = vmatprep.subr.bf16.mxu0 0
    %843 = vmatpush2.bf16.xpose.msra.mxu0 0
    %844 = vmatprep.subr.bf16.mxu0 0
    %845 = vmatpush2.bf16.xpose.msra.mxu0 0
    %846 = vmatprep.subr.bf16.mxu0 0
    %847 = vmatpush2.bf16.xpose.msra.mxu0 0
    %848 = vmatprep.subr.bf16.mxu0 0
    %849 = vmatpush2.bf16.xpose.msra.mxu0 0
    %850 = vmatprep.subr.bf16.mxu0 0
    %851 = vmatpush2.bf16.xpose.msra.mxu0 0
    %852 = vmatprep.subr.bf16.mxu0 0
    %853 = vmatpush2.bf16.xpose.msra.mxu0 0
    %854 = vmatprep.subr.bf16.mxu0 0
    %855 = vmatpush2.bf16.xpose.msra.mxu0 0
    %856 = vmatprep.mubr.bf16.mxu0 0
    %857 = vmatmul.mubr.bf16.gmra.mxu0 %v819
    %v858 = vpop.f32.mrf.mxu0
    %v859 = vadd.f32 %v282, %v858
    %v860 = vpop.f32.mrf.mxu0
    %v861 = vpop.f32.mrf.mxu0
    %v862 = vpop.f32.mrf.mxu0
    %863 = vdwg.mxu0
    %864 = vrot.lane.b32.xlu0 %v267, 124
    %v865 = vpop.permute.xlu0 %864
    %v867 = vsel %vm289, %v267, 0
    %v870 = vsel %vm289, %v865, 0
    %872 = vmatprep.subr.bf16.mxu0 0
    %873 = vmatpush1.bf16.xpose.msra.mxu0 0
    %874 = vmatprep.subr.bf16.mxu0 0
    %875 = vmatpush1.bf16.xpose.msra.mxu0 0
    %876 = vmatprep.subr.bf16.mxu0 0
    %877 = vmatpush1.bf16.xpose.msra.mxu0 0
    %878 = vmatprep.subr.bf16.mxu0 0
    %879 = vmatpush1.bf16.xpose.msra.mxu0 0
    %880 = vmatprep.subr.bf16.mxu0 0
    %881 = vmatpush1.bf16.xpose.msra.mxu0 0
    %882 = vmatprep.subr.bf16.mxu0 0
    %883 = vmatpush1.bf16.xpose.msra.mxu0 0
    %884 = vmatprep.subr.bf16.mxu0 0
    %885 = vmatpush1.bf16.xpose.msra.mxu0 0
    %886 = vmatprep.subr.bf16.mxu0 0
    %887 = vmatpush1.bf16.xpose.msra.mxu0 %v870
    %888 = vmatprep.subr.bf16.mxu0 0
    %889 = vmatpush2.bf16.xpose.msra.mxu0 0
    %890 = vmatprep.subr.bf16.mxu0 0
    %891 = vmatpush2.bf16.xpose.msra.mxu0 0
    %892 = vmatprep.subr.bf16.mxu0 0
    %893 = vmatpush2.bf16.xpose.msra.mxu0 0
    %894 = vmatprep.subr.bf16.mxu0 0
    %895 = vmatpush2.bf16.xpose.msra.mxu0 0
    %896 = vmatprep.subr.bf16.mxu0 0
    %897 = vmatpush2.bf16.xpose.msra.mxu0 0
    %898 = vmatprep.subr.bf16.mxu0 0
    %899 = vmatpush2.bf16.xpose.msra.mxu0 0
    %900 = vmatprep.subr.bf16.mxu0 0
    %901 = vmatpush2.bf16.xpose.msra.mxu0 0
    %902 = vmatprep.subr.bf16.mxu0 0
    %903 = vmatpush2.bf16.xpose.msra.mxu0 0
    %904 = vmatprep.mubr.bf16.mxu0 0
    %905 = vmatmul.mubr.bf16.gmra.mxu0 %v867
    %v906 = vpop.f32.mrf.mxu0
    %v907 = vadd.f32 %v283, %v906
    %v908 = vpop.f32.mrf.mxu0
    %v909 = vpop.f32.mrf.mxu0
    %v910 = vpop.f32.mrf.mxu0
    %911 = vdwg.mxu0
    %912 = vrot.lane.b32.xlu0 %v268, 124
    %v913 = vpop.permute.xlu0 %912
    %v915 = vsel %vm289, %v268, 0
    %v918 = vsel %vm289, %v913, 0
    %920 = vmatprep.subr.bf16.mxu0 0
    %921 = vmatpush1.bf16.xpose.msra.mxu0 0
    %922 = vmatprep.subr.bf16.mxu0 0
    %923 = vmatpush1.bf16.xpose.msra.mxu0 0
    %924 = vmatprep.subr.bf16.mxu0 0
    %925 = vmatpush1.bf16.xpose.msra.mxu0 0
    %926 = vmatprep.subr.bf16.mxu0 0
    %927 = vmatpush1.bf16.xpose.msra.mxu0 0
    %928 = vmatprep.subr.bf16.mxu0 0
    %929 = vmatpush1.bf16.xpose.msra.mxu0 0
    %930 = vmatprep.subr.bf16.mxu0 0
    %931 = vmatpush1.bf16.xpose.msra.mxu0 0
    %932 = vmatprep.subr.bf16.mxu0 0
    %933 = vmatpush1.bf16.xpose.msra.mxu0 0
    %934 = vmatprep.subr.bf16.mxu0 0
    %935 = vmatpush1.bf16.xpose.msra.mxu0 %v918
    %936 = vmatprep.subr.bf16.mxu0 0
    %937 = vmatpush2.bf16.xpose.msra.mxu0 0
    %938 = vmatprep.subr.bf16.mxu0 0
    %939 = vmatpush2.bf16.xpose.msra.mxu0 0
    %940 = vmatprep.subr.bf16.mxu0 0
    %941 = vmatpush2.bf16.xpose.msra.mxu0 0
    %942 = vmatprep.subr.bf16.mxu0 0
    %943 = vmatpush2.bf16.xpose.msra.mxu0 0
    %944 = vmatprep.subr.bf16.mxu0 0
    %945 = vmatpush2.bf16.xpose.msra.mxu0 0
    %946 = vmatprep.subr.bf16.mxu0 0
    %947 = vmatpush2.bf16.xpose.msra.mxu0 0
    %948 = vmatprep.subr.bf16.mxu0 0
    %949 = vmatpush2.bf16.xpose.msra.mxu0 0
    %950 = vmatprep.subr.bf16.mxu0 0
    %951 = vmatpush2.bf16.xpose.msra.mxu0 0
    %952 = vmatprep.mubr.bf16.mxu0 0
    %953 = vmatmul.mubr.bf16.gmra.mxu0 %v915
    %v954 = vpop.f32.mrf.mxu0
    %v955 = vadd.f32 %v284, %v954
    %v956 = vpop.f32.mrf.mxu0
    %v957 = vpop.f32.mrf.mxu0
    %v958 = vpop.f32.mrf.mxu0
    %959 = vdwg.mxu0
    %960 = vrot.lane.b32.xlu0 %v269, 124
    %v961 = vpop.permute.xlu0 %960
    %v963 = vsel %vm289, %v269, 0
    %v966 = vsel %vm289, %v961, 0
    %968 = vmatprep.subr.bf16.mxu0 0
    %969 = vmatpush1.bf16.xpose.msra.mxu0 0
    %970 = vmatprep.subr.bf16.mxu0 0
    %971 = vmatpush1.bf16.xpose.msra.mxu0 0
    %972 = vmatprep.subr.bf16.mxu0 0
    %973 = vmatpush1.bf16.xpose.msra.mxu0 0
    %974 = vmatprep.subr.bf16.mxu0 0
    %975 = vmatpush1.bf16.xpose.msra.mxu0 0
    %976 = vmatprep.subr.bf16.mxu0 0
    %977 = vmatpush1.bf16.xpose.msra.mxu0 0
    %978 = vmatprep.subr.bf16.mxu0 0
    %979 = vmatpush1.bf16.xpose.msra.mxu0 0
    %980 = vmatprep.subr.bf16.mxu0 0
    %981 = vmatpush1.bf16.xpose.msra.mxu0 0
    %982 = vmatprep.subr.bf16.mxu0 0
    %983 = vmatpush1.bf16.xpose.msra.mxu0 %v966
    %984 = vmatprep.subr.bf16.mxu0 0
    %985 = vmatpush2.bf16.xpose.msra.mxu0 0
    %986 = vmatprep.subr.bf16.mxu0 0
    %987 = vmatpush2.bf16.xpose.msra.mxu0 0
    %988 = vmatprep.subr.bf16.mxu0 0
    %989 = vmatpush2.bf16.xpose.msra.mxu0 0
    %990 = vmatprep.subr.bf16.mxu0 0
    %991 = vmatpush2.bf16.xpose.msra.mxu0 0
    %992 = vmatprep.subr.bf16.mxu0 0
    %993 = vmatpush2.bf16.xpose.msra.mxu0 0
    %994 = vmatprep.subr.bf16.mxu0 0
    %995 = vmatpush2.bf16.xpose.msra.mxu0 0
    %996 = vmatprep.subr.bf16.mxu0 0
    %997 = vmatpush2.bf16.xpose.msra.mxu0 0
    %998 = vmatprep.subr.bf16.mxu0 0
    %999 = vmatpush2.bf16.xpose.msra.mxu0 0
    %1000 = vmatprep.mubr.bf16.mxu0 0
    %1001 = vmatmul.mubr.bf16.gmra.mxu0 %v963
    %v1002 = vpop.f32.mrf.mxu0
    %v1003 = vadd.f32 %v285, %v1002
    %v1004 = vpop.f32.mrf.mxu0
    %v1005 = vpop.f32.mrf.mxu0
    %v1006 = vpop.f32.mrf.mxu0
    %1007 = vdwg.mxu0
    %1008 = vrot.lane.b32.xlu0 %v270, 124
    %v1009 = vpop.permute.xlu0 %1008
    %v1011 = vsel %vm289, %v270, 0
    %v1014 = vsel %vm289, %v1009, 0
    %1016 = vmatprep.subr.bf16.mxu0 0
    %1017 = vmatpush1.bf16.xpose.msra.mxu0 0
    %1018 = vmatprep.subr.bf16.mxu0 0
    %1019 = vmatpush1.bf16.xpose.msra.mxu0 0
    %1020 = vmatprep.subr.bf16.mxu0 0
    %1021 = vmatpush1.bf16.xpose.msra.mxu0 0
    %1022 = vmatprep.subr.bf16.mxu0 0
    %1023 = vmatpush1.bf16.xpose.msra.mxu0 0
    %1024 = vmatprep.subr.bf16.mxu0 0
    %1025 = vmatpush1.bf16.xpose.msra.mxu0 0
    %1026 = vmatprep.subr.bf16.mxu0 0
    %1027 = vmatpush1.bf16.xpose.msra.mxu0 0
    %1028 = vmatprep.subr.bf16.mxu0 0
    %1029 = vmatpush1.bf16.xpose.msra.mxu0 0
    %1030 = vmatprep.subr.bf16.mxu0 0
    %1031 = vmatpush1.bf16.xpose.msra.mxu0 %v1014
    %1032 = vmatprep.subr.bf16.mxu0 0
    %1033 = vmatpush2.bf16.xpose.msra.mxu0 0
    %1034 = vmatprep.subr.bf16.mxu0 0
    %1035 = vmatpush2.bf16.xpose.msra.mxu0 0
    %1036 = vmatprep.subr.bf16.mxu0 0
    %1037 = vmatpush2.bf16.xpose.msra.mxu0 0
    %1038 = vmatprep.subr.bf16.mxu0 0
    %1039 = vmatpush2.bf16.xpose.msra.mxu0 0
    %1040 = vmatprep.subr.bf16.mxu0 0
    %1041 = vmatpush2.bf16.xpose.msra.mxu0 0
    %1042 = vmatprep.subr.bf16.mxu0 0
    %1043 = vmatpush2.bf16.xpose.msra.mxu0 0
    %1044 = vmatprep.subr.bf16.mxu0 0
    %1045 = vmatpush2.bf16.xpose.msra.mxu0 0
    %1046 = vmatprep.subr.bf16.mxu0 0
    %1047 = vmatpush2.bf16.xpose.msra.mxu0 0
    %1048 = vmatprep.mubr.bf16.mxu0 0
    %1049 = vmatmul.mubr.bf16.gmra.mxu0 %v1011
    %v1050 = vpop.f32.mrf.mxu0
    %v1051 = vadd.f32 %v286, %v1050
    %v1052 = vpop.f32.mrf.mxu0
    %v1053 = vpop.f32.mrf.mxu0
    %v1054 = vpop.f32.mrf.mxu0
    %1055 = vdwg.mxu0
    %vm1056 = vcmask 64512
    %v1057 = vsel %vm1056, %v331, -inf
    %1058 = vmax.xlane.f32.xlu0 %v1057
    %v1059 = vpop.xlane.xlu0 %1058
    %v1060 = vsel %vm1056, %v379, -inf
    %1061 = vmax.xlane.f32.xlu0 %v1060
    %v1062 = vpop.xlane.xlu0 %1061
    %v1063 = vsel %vm1056, %v427, -inf
    %1064 = vmax.xlane.f32.xlu0 %v1063
    %v1065 = vpop.xlane.xlu0 %1064
    %v1066 = vsel %vm1056, %v475, -inf
    %1067 = vmax.xlane.f32.xlu0 %v1066
    %v1068 = vpop.xlane.xlu0 %1067
    %v1069 = vsel %vm1056, %v523, -inf
    %1070 = vmax.xlane.f32.xlu0 %v1069
    %v1071 = vpop.xlane.xlu0 %1070
    %v1072 = vsel %vm1056, %v571, -inf
    %1073 = vmax.xlane.f32.xlu0 %v1072
    %v1074 = vpop.xlane.xlu0 %1073
    %v1075 = vsel %vm1056, %v619, -inf
    %1076 = vmax.xlane.f32.xlu0 %v1075
    %v1077 = vpop.xlane.xlu0 %1076
    %v1078 = vsel %vm1056, %v667, -inf
    %1079 = vmax.xlane.f32.xlu0 %v1078
    %v1080 = vpop.xlane.xlu0 %1079
    %v1081 = vsel %vm1056, %v715, -inf
    %1082 = vmax.xlane.f32.xlu0 %v1081
    %v1083 = vpop.xlane.xlu0 %1082
    %v1084 = vsel %vm1056, %v763, -inf
    %1085 = vmax.xlane.f32.xlu0 %v1084
    %v1086 = vpop.xlane.xlu0 %1085
    %v1087 = vsel %vm1056, %v811, -inf
    %1088 = vmax.xlane.f32.xlu0 %v1087
    %v1089 = vpop.xlane.xlu0 %1088
    %v1090 = vsel %vm1056, %v859, -inf
    %1091 = vmax.xlane.f32.xlu0 %v1090
    %v1092 = vpop.xlane.xlu0 %1091
    %v1093 = vsel %vm1056, %v907, -inf
    %1094 = vmax.xlane.f32.xlu0 %v1093
    %v1095 = vpop.xlane.xlu0 %1094
    %v1096 = vsel %vm1056, %v955, -inf
    %1097 = vmax.xlane.f32.xlu0 %v1096
    %v1098 = vpop.xlane.xlu0 %1097
    %v1099 = vsel %vm1056, %v1003, -inf
    %1100 = vmax.xlane.f32.xlu0 %v1099
    %v1101 = vpop.xlane.xlu0 %1100
    %v1102 = vsel %vm1056, %v1051, -inf
    %1103 = vmax.xlane.f32.xlu0 %v1102
    %v1104 = vpop.xlane.xlu0 %1103
    %v1105 = vsub.f32 %v331, %v1059
    %v1106 = vsub.f32 %v379, %v1062
    %v1107 = vsub.f32 %v427, %v1065
    %v1108 = vsub.f32 %v475, %v1068
    %v1109 = vsub.f32 %v523, %v1071
    %v1110 = vsub.f32 %v571, %v1074
    %v1111 = vsub.f32 %v619, %v1077
    %v1112 = vsub.f32 %v667, %v1080
    %v1113 = vsub.f32 %v715, %v1083
    %v1114 = vsub.f32 %v763, %v1086
    %v1115 = vsub.f32 %v811, %v1089
    %v1116 = vsub.f32 %v859, %v1092
    %v1117 = vsub.f32 %v907, %v1095
    %v1118 = vsub.f32 %v955, %v1098
    %v1119 = vsub.f32 %v1003, %v1101
    %v1120 = vsub.f32 %v1051, %v1104
    %v1121 = vmul.f32 %v1105, 1.442695
    %v1122 = vpow.pop %v1121
    %v1123 = vmul.f32 %v1106, 1.442695
    %v1124 = vpow.pop %v1123
    %v1125 = vmul.f32 %v1107, 1.442695
    %v1126 = vpow.pop %v1125
    %v1127 = vmul.f32 %v1108, 1.442695
    %v1128 = vpow.pop %v1127
    %v1129 = vmul.f32 %v1109, 1.442695
    %v1130 = vpow.pop %v1129
    %v1131 = vmul.f32 %v1110, 1.442695
    %v1132 = vpow.pop %v1131
    %v1133 = vmul.f32 %v1111, 1.442695
    %v1134 = vpow.pop %v1133
    %v1135 = vmul.f32 %v1112, 1.442695
    %v1136 = vpow.pop %v1135
    %v1137 = vmul.f32 %v1113, 1.442695
    %v1138 = vpow.pop %v1137
    %v1139 = vmul.f32 %v1114, 1.442695
    %v1140 = vpow.pop %v1139
    %v1141 = vmul.f32 %v1115, 1.442695
    %v1142 = vpow.pop %v1141
    %v1143 = vmul.f32 %v1116, 1.442695
    %v1144 = vpow.pop %v1143
    %v1145 = vmul.f32 %v1117, 1.442695
    %v1146 = vpow.pop %v1145
    %v1147 = vmul.f32 %v1118, 1.442695
    %v1148 = vpow.pop %v1147
    %v1149 = vmul.f32 %v1119, 1.442695
    %v1150 = vpow.pop %v1149
    %v1151 = vmul.f32 %v1120, 1.442695
    %v1152 = vpow.pop %v1151
    %v1153 = vsel %vm1056, %v1122, 0.0
    %1154 = vadd.xlane.f32.xlu0 %v1153
    %v1155 = vpop.xlane.xlu0 %1154
    %v1156 = vsel %vm1056, %v1124, 0.0
    %1157 = vadd.xlane.f32.xlu0 %v1156
    %v1158 = vpop.xlane.xlu0 %1157
    %v1159 = vsel %vm1056, %v1126, 0.0
    %1160 = vadd.xlane.f32.xlu0 %v1159
    %v1161 = vpop.xlane.xlu0 %1160
    %v1162 = vsel %vm1056, %v1128, 0.0
    %1163 = vadd.xlane.f32.xlu0 %v1162
    %v1164 = vpop.xlane.xlu0 %1163
    %v1165 = vsel %vm1056, %v1130, 0.0
    %1166 = vadd.xlane.f32.xlu0 %v1165
    %v1167 = vpop.xlane.xlu0 %1166
    %v1168 = vsel %vm1056, %v1132, 0.0
    %1169 = vadd.xlane.f32.xlu0 %v1168
    %v1170 = vpop.xlane.xlu0 %1169
    %v1171 = vsel %vm1056, %v1134, 0.0
    %1172 = vadd.xlane.f32.xlu0 %v1171
    %v1173 = vpop.xlane.xlu0 %1172
    %v1174 = vsel %vm1056, %v1136, 0.0
    %1175 = vadd.xlane.f32.xlu0 %v1174
    %v1176 = vpop.xlane.xlu0 %1175
    %v1177 = vsel %vm1056, %v1138, 0.0
    %1178 = vadd.xlane.f32.xlu0 %v1177
    %v1179 = vpop.xlane.xlu0 %1178
    %v1180 = vsel %vm1056, %v1140, 0.0
    %1181 = vadd.xlane.f32.xlu0 %v1180
    %v1182 = vpop.xlane.xlu0 %1181
    %v1183 = vsel %vm1056, %v1142, 0.0
    %1184 = vadd.xlane.f32.xlu0 %v1183
    %v1185 = vpop.xlane.xlu0 %1184
    %v1186 = vsel %vm1056, %v1144, 0.0
    %1187 = vadd.xlane.f32.xlu0 %v1186
    %v1188 = vpop.xlane.xlu0 %1187
    %v1189 = vsel %vm1056, %v1146, 0.0
    %1190 = vadd.xlane.f32.xlu0 %v1189
    %v1191 = vpop.xlane.xlu0 %1190
    %v1192 = vsel %vm1056, %v1148, 0.0
    %1193 = vadd.xlane.f32.xlu0 %v1192
    %v1194 = vpop.xlane.xlu0 %1193
    %v1195 = vsel %vm1056, %v1150, 0.0
    %1196 = vadd.xlane.f32.xlu0 %v1195
    %v1197 = vpop.xlane.xlu0 %1196
    %v1198 = vsel %vm1056, %v1152, 0.0
    %1199 = vadd.xlane.f32.xlu0 %v1198
    %v1200 = vpop.xlane.xlu0 %1199
    %v1201 = vrcp.pop %v1155
    %v1202 = vrcp.pop %v1158
    %v1203 = vrcp.pop %v1161
    %v1204 = vrcp.pop %v1164
    %v1205 = vrcp.pop %v1167
    %v1206 = vrcp.pop %v1170
    %v1207 = vrcp.pop %v1173
    %v1208 = vrcp.pop %v1176
    %v1209 = vrcp.pop %v1179
    %v1210 = vrcp.pop %v1182
    %v1211 = vrcp.pop %v1185
    %v1212 = vrcp.pop %v1188
    %v1213 = vrcp.pop %v1191
    %v1214 = vrcp.pop %v1194
    %v1215 = vrcp.pop %v1197
    %v1216 = vrcp.pop %v1200
    %v1217 = vmul.f32 %v1122, %v1201
    %v1218 = vmul.f32 %v1124, %v1202
    %v1219 = vmul.f32 %v1126, %v1203
    %v1220 = vmul.f32 %v1128, %v1204
    %v1221 = vmul.f32 %v1130, %v1205
    %v1222 = vmul.f32 %v1132, %v1206
    %v1223 = vmul.f32 %v1134, %v1207
    %v1224 = vmul.f32 %v1136, %v1208
    %v1225 = vmul.f32 %v1138, %v1209
    %v1226 = vmul.f32 %v1140, %v1210
    %v1227 = vmul.f32 %v1142, %v1211
    %v1228 = vmul.f32 %v1144, %v1212
    %v1229 = vmul.f32 %v1146, %v1213
    %v1230 = vmul.f32 %v1148, %v1214
    %v1231 = vmul.f32 %v1150, %v1215
    %v1232 = vmul.f32 %v1152, %v1216
    %v1233 = vpack.c.bf16 %v1217, %v1217
    %v1234 = vpack.c.bf16 %v1218, %v1218
    %v1235 = vpack.c.bf16 %v1219, %v1219
    %v1236 = vpack.c.bf16 %v1220, %v1220
    %v1237 = vpack.c.bf16 %v1221, %v1221
    %v1238 = vpack.c.bf16 %v1222, %v1222
    %v1239 = vpack.c.bf16 %v1223, %v1223
    %v1240 = vpack.c.bf16 %v1224, %v1224
    %v1241 = vpack.c.bf16 %v1225, %v1225
    %v1242 = vpack.c.bf16 %v1226, %v1226
    %v1243 = vpack.c.bf16 %v1227, %v1227
    %v1244 = vpack.c.bf16 %v1228, %v1228
    %v1245 = vpack.c.bf16 %v1229, %v1229
    %v1246 = vpack.c.bf16 %v1230, %v1230
    %v1247 = vpack.c.bf16 %v1231, %v1231
    %v1248 = vpack.c.bf16 %v1232, %v1232
    %1249 = vrot.lane.b32.xlu0 %v255, 120
    %v1250 = vpop.permute.xlu0 %1249
    %v1252 = vsel %vm1056, %v1233, 0
    %vm1254 = vcmask 1043456
    %v1256 = vsel %vm1254, %v1250, 0
    %1258 = vmatprep.subr.bf16.mxu0 0
    %1259 = vmatpush1.bf16.msra.mxu0 0
    %1260 = vmatprep.subr.bf16.mxu0 0
    %1261 = vmatpush1.bf16.msra.mxu0 0
    %1262 = vmatprep.subr.bf16.mxu0 0
    %1263 = vmatpush1.bf16.msra.mxu0 0
    %1264 = vmatprep.subr.bf16.mxu0 0
    %1265 = vmatpush1.bf16.msra.mxu0 0
    %1266 = vmatprep.subr.bf16.mxu0 0
    %1267 = vmatpush1.bf16.msra.mxu0 0
    %1268 = vmatprep.subr.bf16.mxu0 0
    %1269 = vmatpush1.bf16.msra.mxu0 0
    %1270 = vmatprep.subr.bf16.mxu0 0
    %1271 = vmatpush1.bf16.msra.mxu0 0
    %1272 = vmatprep.subr.bf16.mxu0 0
    %1273 = vmatpush1.bf16.msra.mxu0 %v1256
    %1274 = vmatprep.subr.bf16.mxu0 0
    %1275 = vmatpush2.bf16.msra.mxu0 0
    %1276 = vmatprep.subr.bf16.mxu0 0
    %1277 = vmatpush2.bf16.msra.mxu0 0
    %1278 = vmatprep.subr.bf16.mxu0 0
    %1279 = vmatpush2.bf16.msra.mxu0 0
    %1280 = vmatprep.subr.bf16.mxu0 0
    %1281 = vmatpush2.bf16.msra.mxu0 0
    %1282 = vmatprep.subr.bf16.mxu0 0
    %1283 = vmatpush2.bf16.msra.mxu0 0
    %1284 = vmatprep.subr.bf16.mxu0 0
    %1285 = vmatpush2.bf16.msra.mxu0 0
    %1286 = vmatprep.subr.bf16.mxu0 0
    %1287 = vmatpush2.bf16.msra.mxu0 0
    %1288 = vmatprep.subr.bf16.mxu0 0
    %1289 = vmatpush2.bf16.msra.mxu0 0
    %1290 = vmatprep.mubr.bf16.mxu0 0
    %1291 = vmatmul.mubr.bf16.gmra.mxu0 %v1252
    %v1292 = vpop.f32.mrf.mxu0
    %v1293 = vadd.f32 0.0, %v1292
    %v1294 = vpop.f32.mrf.mxu0
    %v1295 = vpop.f32.mrf.mxu0
    %v1296 = vpop.f32.mrf.mxu0
    %1297 = vdwg.mxu0
    %1298 = vrot.lane.b32.xlu0 %v256, 120
    %v1299 = vpop.permute.xlu0 %1298
    %v1301 = vsel %vm1056, %v1234, 0
    %v1304 = vsel %vm1254, %v1299, 0
    %1306 = vmatprep.subr.bf16.mxu0 0
    %1307 = vmatpush1.bf16.msra.mxu0 0
    %1308 = vmatprep.subr.bf16.mxu0 0
    %1309 = vmatpush1.bf16.msra.mxu0 0
    %1310 = vmatprep.subr.bf16.mxu0 0
    %1311 = vmatpush1.bf16.msra.mxu0 0
    %1312 = vmatprep.subr.bf16.mxu0 0
    %1313 = vmatpush1.bf16.msra.mxu0 0
    %1314 = vmatprep.subr.bf16.mxu0 0
    %1315 = vmatpush1.bf16.msra.mxu0 0
    %1316 = vmatprep.subr.bf16.mxu0 0
    %1317 = vmatpush1.bf16.msra.mxu0 0
    %1318 = vmatprep.subr.bf16.mxu0 0
    %1319 = vmatpush1.bf16.msra.mxu0 0
    %1320 = vmatprep.subr.bf16.mxu0 0
    %1321 = vmatpush1.bf16.msra.mxu0 %v1304
    %1322 = vmatprep.subr.bf16.mxu0 0
    %1323 = vmatpush2.bf16.msra.mxu0 0
    %1324 = vmatprep.subr.bf16.mxu0 0
    %1325 = vmatpush2.bf16.msra.mxu0 0
    %1326 = vmatprep.subr.bf16.mxu0 0
    %1327 = vmatpush2.bf16.msra.mxu0 0
    %1328 = vmatprep.subr.bf16.mxu0 0
    %1329 = vmatpush2.bf16.msra.mxu0 0
    %1330 = vmatprep.subr.bf16.mxu0 0
    %1331 = vmatpush2.bf16.msra.mxu0 0
    %1332 = vmatprep.subr.bf16.mxu0 0
    %1333 = vmatpush2.bf16.msra.mxu0 0
    %1334 = vmatprep.subr.bf16.mxu0 0
    %1335 = vmatpush2.bf16.msra.mxu0 0
    %1336 = vmatprep.subr.bf16.mxu0 0
    %1337 = vmatpush2.bf16.msra.mxu0 0
    %1338 = vmatprep.mubr.bf16.mxu0 0
    %1339 = vmatmul.mubr.bf16.gmra.mxu0 %v1301
    %v1340 = vpop.f32.mrf.mxu0
    %v1341 = vadd.f32 0.0, %v1340
    %v1342 = vpop.f32.mrf.mxu0
    %v1343 = vpop.f32.mrf.mxu0
    %v1344 = vpop.f32.mrf.mxu0
    %1345 = vdwg.mxu0
    %1346 = vrot.lane.b32.xlu0 %v257, 120
    %v1347 = vpop.permute.xlu0 %1346
    %v1349 = vsel %vm1056, %v1235, 0
    %v1352 = vsel %vm1254, %v1347, 0
    %1354 = vmatprep.subr.bf16.mxu0 0
    %1355 = vmatpush1.bf16.msra.mxu0 0
    %1356 = vmatprep.subr.bf16.mxu0 0
    %1357 = vmatpush1.bf16.msra.mxu0 0
    %1358 = vmatprep.subr.bf16.mxu0 0
    %1359 = vmatpush1.bf16.msra.mxu0 0
    %1360 = vmatprep.subr.bf16.mxu0 0
    %1361 = vmatpush1.bf16.msra.mxu0 0
    %1362 = vmatprep.subr.bf16.mxu0 0
    %1363 = vmatpush1.bf16.msra.mxu0 0
    %1364 = vmatprep.subr.bf16.mxu0 0
    %1365 = vmatpush1.bf16.msra.mxu0 0
    %1366 = vmatprep.subr.bf16.mxu0 0
    %1367 = vmatpush1.bf16.msra.mxu0 0
    %1368 = vmatprep.subr.bf16.mxu0 0
    %1369 = vmatpush1.bf16.msra.mxu0 %v1352
    %1370 = vmatprep.subr.bf16.mxu0 0
    %1371 = vmatpush2.bf16.msra.mxu0 0
    %1372 = vmatprep.subr.bf16.mxu0 0
    %1373 = vmatpush2.bf16.msra.mxu0 0
    %1374 = vmatprep.subr.bf16.mxu0 0
    %1375 = vmatpush2.bf16.msra.mxu0 0
    %1376 = vmatprep.subr.bf16.mxu0 0
    %1377 = vmatpush2.bf16.msra.mxu0 0
    %1378 = vmatprep.subr.bf16.mxu0 0
    %1379 = vmatpush2.bf16.msra.mxu0 0
    %1380 = vmatprep.subr.bf16.mxu0 0
    %1381 = vmatpush2.bf16.msra.mxu0 0
    %1382 = vmatprep.subr.bf16.mxu0 0
    %1383 = vmatpush2.bf16.msra.mxu0 0
    %1384 = vmatprep.subr.bf16.mxu0 0
    %1385 = vmatpush2.bf16.msra.mxu0 0
    %1386 = vmatprep.mubr.bf16.mxu0 0
    %1387 = vmatmul.mubr.bf16.gmra.mxu0 %v1349
    %v1388 = vpop.f32.mrf.mxu0
    %v1389 = vadd.f32 0.0, %v1388
    %v1390 = vpop.f32.mrf.mxu0
    %v1391 = vpop.f32.mrf.mxu0
    %v1392 = vpop.f32.mrf.mxu0
    %1393 = vdwg.mxu0
    %1394 = vrot.lane.b32.xlu0 %v258, 120
    %v1395 = vpop.permute.xlu0 %1394
    %v1397 = vsel %vm1056, %v1236, 0
    %v1400 = vsel %vm1254, %v1395, 0
    %1402 = vmatprep.subr.bf16.mxu0 0
    %1403 = vmatpush1.bf16.msra.mxu0 0
    %1404 = vmatprep.subr.bf16.mxu0 0
    %1405 = vmatpush1.bf16.msra.mxu0 0
    %1406 = vmatprep.subr.bf16.mxu0 0
    %1407 = vmatpush1.bf16.msra.mxu0 0
    %1408 = vmatprep.subr.bf16.mxu0 0
    %1409 = vmatpush1.bf16.msra.mxu0 0
    %1410 = vmatprep.subr.bf16.mxu0 0
    %1411 = vmatpush1.bf16.msra.mxu0 0
    %1412 = vmatprep.subr.bf16.mxu0 0
    %1413 = vmatpush1.bf16.msra.mxu0 0
    %1414 = vmatprep.subr.bf16.mxu0 0
    %1415 = vmatpush1.bf16.msra.mxu0 0
    %1416 = vmatprep.subr.bf16.mxu0 0
    %1417 = vmatpush1.bf16.msra.mxu0 %v1400
    %1418 = vmatprep.subr.bf16.mxu0 0
    %1419 = vmatpush2.bf16.msra.mxu0 0
    %1420 = vmatprep.subr.bf16.mxu0 0
    %1421 = vmatpush2.bf16.msra.mxu0 0
    %1422 = vmatprep.subr.bf16.mxu0 0
    %1423 = vmatpush2.bf16.msra.mxu0 0
    %1424 = vmatprep.subr.bf16.mxu0 0
    %1425 = vmatpush2.bf16.msra.mxu0 0
    %1426 = vmatprep.subr.bf16.mxu0 0
    %1427 = vmatpush2.bf16.msra.mxu0 0
    %1428 = vmatprep.subr.bf16.mxu0 0
    %1429 = vmatpush2.bf16.msra.mxu0 0
    %1430 = vmatprep.subr.bf16.mxu0 0
    %1431 = vmatpush2.bf16.msra.mxu0 0
    %1432 = vmatprep.subr.bf16.mxu0 0
    %1433 = vmatpush2.bf16.msra.mxu0 0
    %1434 = vmatprep.mubr.bf16.mxu0 0
    %1435 = vmatmul.mubr.bf16.gmra.mxu0 %v1397
    %v1436 = vpop.f32.mrf.mxu0
    %v1437 = vadd.f32 0.0, %v1436
    %v1438 = vpop.f32.mrf.mxu0
    %v1439 = vpop.f32.mrf.mxu0
    %v1440 = vpop.f32.mrf.mxu0
    %1441 = vdwg.mxu0
    %1442 = vrot.lane.b32.xlu0 %v259, 120
    %v1443 = vpop.permute.xlu0 %1442
    %v1445 = vsel %vm1056, %v1237, 0
    %v1448 = vsel %vm1254, %v1443, 0
    %1450 = vmatprep.subr.bf16.mxu0 0
    %1451 = vmatpush1.bf16.msra.mxu0 0
    %1452 = vmatprep.subr.bf16.mxu0 0
    %1453 = vmatpush1.bf16.msra.mxu0 0
    %1454 = vmatprep.subr.bf16.mxu0 0
    %1455 = vmatpush1.bf16.msra.mxu0 0
    %1456 = vmatprep.subr.bf16.mxu0 0
    %1457 = vmatpush1.bf16.msra.mxu0 0
    %1458 = vmatprep.subr.bf16.mxu0 0
    %1459 = vmatpush1.bf16.msra.mxu0 0
    %1460 = vmatprep.subr.bf16.mxu0 0
    %1461 = vmatpush1.bf16.msra.mxu0 0
    %1462 = vmatprep.subr.bf16.mxu0 0
    %1463 = vmatpush1.bf16.msra.mxu0 0
    %1464 = vmatprep.subr.bf16.mxu0 0
    %1465 = vmatpush1.bf16.msra.mxu0 %v1448
    %1466 = vmatprep.subr.bf16.mxu0 0
    %1467 = vmatpush2.bf16.msra.mxu0 0
    %1468 = vmatprep.subr.bf16.mxu0 0
    %1469 = vmatpush2.bf16.msra.mxu0 0
    %1470 = vmatprep.subr.bf16.mxu0 0
    %1471 = vmatpush2.bf16.msra.mxu0 0
    %1472 = vmatprep.subr.bf16.mxu0 0
    %1473 = vmatpush2.bf16.msra.mxu0 0
    %1474 = vmatprep.subr.bf16.mxu0 0
    %1475 = vmatpush2.bf16.msra.mxu0 0
    %1476 = vmatprep.subr.bf16.mxu0 0
    %1477 = vmatpush2.bf16.msra.mxu0 0
    %1478 = vmatprep.subr.bf16.mxu0 0
    %1479 = vmatpush2.bf16.msra.mxu0 0
    %1480 = vmatprep.subr.bf16.mxu0 0
    %1481 = vmatpush2.bf16.msra.mxu0 0
    %1482 = vmatprep.mubr.bf16.mxu0 0
    %1483 = vmatmul.mubr.bf16.gmra.mxu0 %v1445
    %v1484 = vpop.f32.mrf.mxu0
    %v1485 = vadd.f32 0.0, %v1484
    %v1486 = vpop.f32.mrf.mxu0
    %v1487 = vpop.f32.mrf.mxu0
    %v1488 = vpop.f32.mrf.mxu0
    %1489 = vdwg.mxu0
    %1490 = vrot.lane.b32.xlu0 %v260, 120
    %v1491 = vpop.permute.xlu0 %1490
    %v1493 = vsel %vm1056, %v1238, 0
    %v1496 = vsel %vm1254, %v1491, 0
    %1498 = vmatprep.subr.bf16.mxu0 0
    %1499 = vmatpush1.bf16.msra.mxu0 0
    %1500 = vmatprep.subr.bf16.mxu0 0
    %1501 = vmatpush1.bf16.msra.mxu0 0
    %1502 = vmatprep.subr.bf16.mxu0 0
    %1503 = vmatpush1.bf16.msra.mxu0 0
    %1504 = vmatprep.subr.bf16.mxu0 0
    %1505 = vmatpush1.bf16.msra.mxu0 0
    %1506 = vmatprep.subr.bf16.mxu0 0
    %1507 = vmatpush1.bf16.msra.mxu0 0
    %1508 = vmatprep.subr.bf16.mxu0 0
    %1509 = vmatpush1.bf16.msra.mxu0 0
    %1510 = vmatprep.subr.bf16.mxu0 0
    %1511 = vmatpush1.bf16.msra.mxu0 0
    %1512 = vmatprep.subr.bf16.mxu0 0
    %1513 = vmatpush1.bf16.msra.mxu0 %v1496
    %1514 = vmatprep.subr.bf16.mxu0 0
    %1515 = vmatpush2.bf16.msra.mxu0 0
    %1516 = vmatprep.subr.bf16.mxu0 0
    %1517 = vmatpush2.bf16.msra.mxu0 0
    %1518 = vmatprep.subr.bf16.mxu0 0
    %1519 = vmatpush2.bf16.msra.mxu0 0
    %1520 = vmatprep.subr.bf16.mxu0 0
    %1521 = vmatpush2.bf16.msra.mxu0 0
    %1522 = vmatprep.subr.bf16.mxu0 0
    %1523 = vmatpush2.bf16.msra.mxu0 0
    %1524 = vmatprep.subr.bf16.mxu0 0
    %1525 = vmatpush2.bf16.msra.mxu0 0
    %1526 = vmatprep.subr.bf16.mxu0 0
    %1527 = vmatpush2.bf16.msra.mxu0 0
    %1528 = vmatprep.subr.bf16.mxu0 0
    %1529 = vmatpush2.bf16.msra.mxu0 0
    %1530 = vmatprep.mubr.bf16.mxu0 0
    %1531 = vmatmul.mubr.bf16.gmra.mxu0 %v1493
    %v1532 = vpop.f32.mrf.mxu0
    %v1533 = vadd.f32 0.0, %v1532
    %v1534 = vpop.f32.mrf.mxu0
    %v1535 = vpop.f32.mrf.mxu0
    %v1536 = vpop.f32.mrf.mxu0
    %1537 = vdwg.mxu0
    %1538 = vrot.lane.b32.xlu0 %v261, 120
    %v1539 = vpop.permute.xlu0 %1538
    %v1541 = vsel %vm1056, %v1239, 0
    %v1544 = vsel %vm1254, %v1539, 0
    %1546 = vmatprep.subr.bf16.mxu0 0
    %1547 = vmatpush1.bf16.msra.mxu0 0
    %1548 = vmatprep.subr.bf16.mxu0 0
    %1549 = vmatpush1.bf16.msra.mxu0 0
    %1550 = vmatprep.subr.bf16.mxu0 0
    %1551 = vmatpush1.bf16.msra.mxu0 0
    %1552 = vmatprep.subr.bf16.mxu0 0
    %1553 = vmatpush1.bf16.msra.mxu0 0
    %1554 = vmatprep.subr.bf16.mxu0 0
    %1555 = vmatpush1.bf16.msra.mxu0 0
    %1556 = vmatprep.subr.bf16.mxu0 0
    %1557 = vmatpush1.bf16.msra.mxu0 0
    %1558 = vmatprep.subr.bf16.mxu0 0
    %1559 = vmatpush1.bf16.msra.mxu0 0
    %1560 = vmatprep.subr.bf16.mxu0 0
    %1561 = vmatpush1.bf16.msra.mxu0 %v1544
    %1562 = vmatprep.subr.bf16.mxu0 0
    %1563 = vmatpush2.bf16.msra.mxu0 0
    %1564 = vmatprep.subr.bf16.mxu0 0
    %1565 = vmatpush2.bf16.msra.mxu0 0
    %1566 = vmatprep.subr.bf16.mxu0 0
    %1567 = vmatpush2.bf16.msra.mxu0 0
    %1568 = vmatprep.subr.bf16.mxu0 0
    %1569 = vmatpush2.bf16.msra.mxu0 0
    %1570 = vmatprep.subr.bf16.mxu0 0
    %1571 = vmatpush2.bf16.msra.mxu0 0
    %1572 = vmatprep.subr.bf16.mxu0 0
    %1573 = vmatpush2.bf16.msra.mxu0 0
    %1574 = vmatprep.subr.bf16.mxu0 0
    %1575 = vmatpush2.bf16.msra.mxu0 0
    %1576 = vmatprep.subr.bf16.mxu0 0
    %1577 = vmatpush2.bf16.msra.mxu0 0
    %1578 = vmatprep.mubr.bf16.mxu0 0
    %1579 = vmatmul.mubr.bf16.gmra.mxu0 %v1541
    %v1580 = vpop.f32.mrf.mxu0
    %v1581 = vadd.f32 0.0, %v1580
    %v1582 = vpop.f32.mrf.mxu0
    %v1583 = vpop.f32.mrf.mxu0
    %v1584 = vpop.f32.mrf.mxu0
    %1585 = vdwg.mxu0
    %1586 = vrot.lane.b32.xlu0 %v262, 120
    %v1587 = vpop.permute.xlu0 %1586
    %v1589 = vsel %vm1056, %v1240, 0
    %v1592 = vsel %vm1254, %v1587, 0
    %1594 = vmatprep.subr.bf16.mxu0 0
    %1595 = vmatpush1.bf16.msra.mxu0 0
    %1596 = vmatprep.subr.bf16.mxu0 0
    %1597 = vmatpush1.bf16.msra.mxu0 0
    %1598 = vmatprep.subr.bf16.mxu0 0
    %1599 = vmatpush1.bf16.msra.mxu0 0
    %1600 = vmatprep.subr.bf16.mxu0 0
    %1601 = vmatpush1.bf16.msra.mxu0 0
    %1602 = vmatprep.subr.bf16.mxu0 0
    %1603 = vmatpush1.bf16.msra.mxu0 0
    %1604 = vmatprep.subr.bf16.mxu0 0
    %1605 = vmatpush1.bf16.msra.mxu0 0
    %1606 = vmatprep.subr.bf16.mxu0 0
    %1607 = vmatpush1.bf16.msra.mxu0 0
    %1608 = vmatprep.subr.bf16.mxu0 0
    %1609 = vmatpush1.bf16.msra.mxu0 %v1592
    %1610 = vmatprep.subr.bf16.mxu0 0
    %1611 = vmatpush2.bf16.msra.mxu0 0
    %1612 = vmatprep.subr.bf16.mxu0 0
    %1613 = vmatpush2.bf16.msra.mxu0 0
    %1614 = vmatprep.subr.bf16.mxu0 0
    %1615 = vmatpush2.bf16.msra.mxu0 0
    %1616 = vmatprep.subr.bf16.mxu0 0
    %1617 = vmatpush2.bf16.msra.mxu0 0
    %1618 = vmatprep.subr.bf16.mxu0 0
    %1619 = vmatpush2.bf16.msra.mxu0 0
    %1620 = vmatprep.subr.bf16.mxu0 0
    %1621 = vmatpush2.bf16.msra.mxu0 0
    %1622 = vmatprep.subr.bf16.mxu0 0
    %1623 = vmatpush2.bf16.msra.mxu0 0
    %1624 = vmatprep.subr.bf16.mxu0 0
    %1625 = vmatpush2.bf16.msra.mxu0 0
    %1626 = vmatprep.mubr.bf16.mxu0 0
    %1627 = vmatmul.mubr.bf16.gmra.mxu0 %v1589
    %v1628 = vpop.f32.mrf.mxu0
    %v1629 = vadd.f32 0.0, %v1628
    %v1630 = vpop.f32.mrf.mxu0
    %v1631 = vpop.f32.mrf.mxu0
    %v1632 = vpop.f32.mrf.mxu0
    %1633 = vdwg.mxu0
    %1634 = vrot.lane.b32.xlu0 %v263, 120
    %v1635 = vpop.permute.xlu0 %1634
    %v1637 = vsel %vm1056, %v1241, 0
    %v1640 = vsel %vm1254, %v1635, 0
    %1642 = vmatprep.subr.bf16.mxu0 0
    %1643 = vmatpush1.bf16.msra.mxu0 0
    %1644 = vmatprep.subr.bf16.mxu0 0
    %1645 = vmatpush1.bf16.msra.mxu0 0
    %1646 = vmatprep.subr.bf16.mxu0 0
    %1647 = vmatpush1.bf16.msra.mxu0 0
    %1648 = vmatprep.subr.bf16.mxu0 0
    %1649 = vmatpush1.bf16.msra.mxu0 0
    %1650 = vmatprep.subr.bf16.mxu0 0
    %1651 = vmatpush1.bf16.msra.mxu0 0
    %1652 = vmatprep.subr.bf16.mxu0 0
    %1653 = vmatpush1.bf16.msra.mxu0 0
    %1654 = vmatprep.subr.bf16.mxu0 0
    %1655 = vmatpush1.bf16.msra.mxu0 0
    %1656 = vmatprep.subr.bf16.mxu0 0
    %1657 = vmatpush1.bf16.msra.mxu0 %v1640
    %1658 = vmatprep.subr.bf16.mxu0 0
    %1659 = vmatpush2.bf16.msra.mxu0 0
    %1660 = vmatprep.subr.bf16.mxu0 0
    %1661 = vmatpush2.bf16.msra.mxu0 0
    %1662 = vmatprep.subr.bf16.mxu0 0
    %1663 = vmatpush2.bf16.msra.mxu0 0
    %1664 = vmatprep.subr.bf16.mxu0 0
    %1665 = vmatpush2.bf16.msra.mxu0 0
    %1666 = vmatprep.subr.bf16.mxu0 0
    %1667 = vmatpush2.bf16.msra.mxu0 0
    %1668 = vmatprep.subr.bf16.mxu0 0
    %1669 = vmatpush2.bf16.msra.mxu0 0
    %1670 = vmatprep.subr.bf16.mxu0 0
    %1671 = vmatpush2.bf16.msra.mxu0 0
    %1672 = vmatprep.subr.bf16.mxu0 0
    %1673 = vmatpush2.bf16.msra.mxu0 0
    %1674 = vmatprep.mubr.bf16.mxu0 0
    %1675 = vmatmul.mubr.bf16.gmra.mxu0 %v1637
    %v1676 = vpop.f32.mrf.mxu0
    %v1677 = vadd.f32 0.0, %v1676
    %v1678 = vpop.f32.mrf.mxu0
    %v1679 = vpop.f32.mrf.mxu0
    %v1680 = vpop.f32.mrf.mxu0
    %1681 = vdwg.mxu0
    %1682 = vrot.lane.b32.xlu0 %v264, 120
    %v1683 = vpop.permute.xlu0 %1682
    %v1685 = vsel %vm1056, %v1242, 0
    %v1688 = vsel %vm1254, %v1683, 0
    %1690 = vmatprep.subr.bf16.mxu0 0
    %1691 = vmatpush1.bf16.msra.mxu0 0
    %1692 = vmatprep.subr.bf16.mxu0 0
    %1693 = vmatpush1.bf16.msra.mxu0 0
    %1694 = vmatprep.subr.bf16.mxu0 0
    %1695 = vmatpush1.bf16.msra.mxu0 0
    %1696 = vmatprep.subr.bf16.mxu0 0
    %1697 = vmatpush1.bf16.msra.mxu0 0
    %1698 = vmatprep.subr.bf16.mxu0 0
    %1699 = vmatpush1.bf16.msra.mxu0 0
    %1700 = vmatprep.subr.bf16.mxu0 0
    %1701 = vmatpush1.bf16.msra.mxu0 0
    %1702 = vmatprep.subr.bf16.mxu0 0
    %1703 = vmatpush1.bf16.msra.mxu0 0
    %1704 = vmatprep.subr.bf16.mxu0 0
    %1705 = vmatpush1.bf16.msra.mxu0 %v1688
    %1706 = vmatprep.subr.bf16.mxu0 0
    %1707 = vmatpush2.bf16.msra.mxu0 0
    %1708 = vmatprep.subr.bf16.mxu0 0
    %1709 = vmatpush2.bf16.msra.mxu0 0
    %1710 = vmatprep.subr.bf16.mxu0 0
    %1711 = vmatpush2.bf16.msra.mxu0 0
    %1712 = vmatprep.subr.bf16.mxu0 0
    %1713 = vmatpush2.bf16.msra.mxu0 0
    %1714 = vmatprep.subr.bf16.mxu0 0
    %1715 = vmatpush2.bf16.msra.mxu0 0
    %1716 = vmatprep.subr.bf16.mxu0 0
    %1717 = vmatpush2.bf16.msra.mxu0 0
    %1718 = vmatprep.subr.bf16.mxu0 0
    %1719 = vmatpush2.bf16.msra.mxu0 0
    %1720 = vmatprep.subr.bf16.mxu0 0
    %1721 = vmatpush2.bf16.msra.mxu0 0
    %1722 = vmatprep.mubr.bf16.mxu0 0
    %1723 = vmatmul.mubr.bf16.gmra.mxu0 %v1685
    %v1724 = vpop.f32.mrf.mxu0
    %v1725 = vadd.f32 0.0, %v1724
    %v1726 = vpop.f32.mrf.mxu0
    %v1727 = vpop.f32.mrf.mxu0
    %v1728 = vpop.f32.mrf.mxu0
    %1729 = vdwg.mxu0
    %1730 = vrot.lane.b32.xlu0 %v265, 120
    %v1731 = vpop.permute.xlu0 %1730
    %v1733 = vsel %vm1056, %v1243, 0
    %v1736 = vsel %vm1254, %v1731, 0
    %1738 = vmatprep.subr.bf16.mxu0 0
    %1739 = vmatpush1.bf16.msra.mxu0 0
    %1740 = vmatprep.subr.bf16.mxu0 0
    %1741 = vmatpush1.bf16.msra.mxu0 0
    %1742 = vmatprep.subr.bf16.mxu0 0
    %1743 = vmatpush1.bf16.msra.mxu0 0
    %1744 = vmatprep.subr.bf16.mxu0 0
    %1745 = vmatpush1.bf16.msra.mxu0 0
    %1746 = vmatprep.subr.bf16.mxu0 0
    %1747 = vmatpush1.bf16.msra.mxu0 0
    %1748 = vmatprep.subr.bf16.mxu0 0
    %1749 = vmatpush1.bf16.msra.mxu0 0
    %1750 = vmatprep.subr.bf16.mxu0 0
    %1751 = vmatpush1.bf16.msra.mxu0 0
    %1752 = vmatprep.subr.bf16.mxu0 0
    %1753 = vmatpush1.bf16.msra.mxu0 %v1736
    %1754 = vmatprep.subr.bf16.mxu0 0
    %1755 = vmatpush2.bf16.msra.mxu0 0
    %1756 = vmatprep.subr.bf16.mxu0 0
    %1757 = vmatpush2.bf16.msra.mxu0 0
    %1758 = vmatprep.subr.bf16.mxu0 0
    %1759 = vmatpush2.bf16.msra.mxu0 0
    %1760 = vmatprep.subr.bf16.mxu0 0
    %1761 = vmatpush2.bf16.msra.mxu0 0
    %1762 = vmatprep.subr.bf16.mxu0 0
    %1763 = vmatpush2.bf16.msra.mxu0 0
    %1764 = vmatprep.subr.bf16.mxu0 0
    %1765 = vmatpush2.bf16.msra.mxu0 0
    %1766 = vmatprep.subr.bf16.mxu0 0
    %1767 = vmatpush2.bf16.msra.mxu0 0
    %1768 = vmatprep.subr.bf16.mxu0 0
    %1769 = vmatpush2.bf16.msra.mxu0 0
    %1770 = vmatprep.mubr.bf16.mxu0 0
    %1771 = vmatmul.mubr.bf16.gmra.mxu0 %v1733
    %v1772 = vpop.f32.mrf.mxu0
    %v1773 = vadd.f32 0.0, %v1772
    %v1774 = vpop.f32.mrf.mxu0
    %v1775 = vpop.f32.mrf.mxu0
    %v1776 = vpop.f32.mrf.mxu0
    %1777 = vdwg.mxu0
    %1778 = vrot.lane.b32.xlu0 %v266, 120
    %v1779 = vpop.permute.xlu0 %1778
    %v1781 = vsel %vm1056, %v1244, 0
    %v1784 = vsel %vm1254, %v1779, 0
    %1786 = vmatprep.subr.bf16.mxu0 0
    %1787 = vmatpush1.bf16.msra.mxu0 0
    %1788 = vmatprep.subr.bf16.mxu0 0
    %1789 = vmatpush1.bf16.msra.mxu0 0
    %1790 = vmatprep.subr.bf16.mxu0 0
    %1791 = vmatpush1.bf16.msra.mxu0 0
    %1792 = vmatprep.subr.bf16.mxu0 0
    %1793 = vmatpush1.bf16.msra.mxu0 0
    %1794 = vmatprep.subr.bf16.mxu0 0
    %1795 = vmatpush1.bf16.msra.mxu0 0
    %1796 = vmatprep.subr.bf16.mxu0 0
    %1797 = vmatpush1.bf16.msra.mxu0 0
    %1798 = vmatprep.subr.bf16.mxu0 0
    %1799 = vmatpush1.bf16.msra.mxu0 0
    %1800 = vmatprep.subr.bf16.mxu0 0
    %1801 = vmatpush1.bf16.msra.mxu0 %v1784
    %1802 = vmatprep.subr.bf16.mxu0 0
    %1803 = vmatpush2.bf16.msra.mxu0 0
    %1804 = vmatprep.subr.bf16.mxu0 0
    %1805 = vmatpush2.bf16.msra.mxu0 0
    %1806 = vmatprep.subr.bf16.mxu0 0
    %1807 = vmatpush2.bf16.msra.mxu0 0
    %1808 = vmatprep.subr.bf16.mxu0 0
    %1809 = vmatpush2.bf16.msra.mxu0 0
    %1810 = vmatprep.subr.bf16.mxu0 0
    %1811 = vmatpush2.bf16.msra.mxu0 0
    %1812 = vmatprep.subr.bf16.mxu0 0
    %1813 = vmatpush2.bf16.msra.mxu0 0
    %1814 = vmatprep.subr.bf16.mxu0 0
    %1815 = vmatpush2.bf16.msra.mxu0 0
    %1816 = vmatprep.subr.bf16.mxu0 0
    %1817 = vmatpush2.bf16.msra.mxu0 0
    %1818 = vmatprep.mubr.bf16.mxu0 0
    %1819 = vmatmul.mubr.bf16.gmra.mxu0 %v1781
    %v1820 = vpop.f32.mrf.mxu0
    %v1821 = vadd.f32 0.0, %v1820
    %v1822 = vpop.f32.mrf.mxu0
    %v1823 = vpop.f32.mrf.mxu0
    %v1824 = vpop.f32.mrf.mxu0
    %1825 = vdwg.mxu0
    %1826 = vrot.lane.b32.xlu0 %v267, 120
    %v1827 = vpop.permute.xlu0 %1826
    %v1829 = vsel %vm1056, %v1245, 0
    %v1832 = vsel %vm1254, %v1827, 0
    %1834 = vmatprep.subr.bf16.mxu0 0
    %1835 = vmatpush1.bf16.msra.mxu0 0
    %1836 = vmatprep.subr.bf16.mxu0 0
    %1837 = vmatpush1.bf16.msra.mxu0 0
    %1838 = vmatprep.subr.bf16.mxu0 0
    %1839 = vmatpush1.bf16.msra.mxu0 0
    %1840 = vmatprep.subr.bf16.mxu0 0
    %1841 = vmatpush1.bf16.msra.mxu0 0
    %1842 = vmatprep.subr.bf16.mxu0 0
    %1843 = vmatpush1.bf16.msra.mxu0 0
    %1844 = vmatprep.subr.bf16.mxu0 0
    %1845 = vmatpush1.bf16.msra.mxu0 0
    %1846 = vmatprep.subr.bf16.mxu0 0
    %1847 = vmatpush1.bf16.msra.mxu0 0
    %1848 = vmatprep.subr.bf16.mxu0 0
    %1849 = vmatpush1.bf16.msra.mxu0 %v1832
    %1850 = vmatprep.subr.bf16.mxu0 0
    %1851 = vmatpush2.bf16.msra.mxu0 0
    %1852 = vmatprep.subr.bf16.mxu0 0
    %1853 = vmatpush2.bf16.msra.mxu0 0
    %1854 = vmatprep.subr.bf16.mxu0 0
    %1855 = vmatpush2.bf16.msra.mxu0 0
    %1856 = vmatprep.subr.bf16.mxu0 0
    %1857 = vmatpush2.bf16.msra.mxu0 0
    %1858 = vmatprep.subr.bf16.mxu0 0
    %1859 = vmatpush2.bf16.msra.mxu0 0
    %1860 = vmatprep.subr.bf16.mxu0 0
    %1861 = vmatpush2.bf16.msra.mxu0 0
    %1862 = vmatprep.subr.bf16.mxu0 0
    %1863 = vmatpush2.bf16.msra.mxu0 0
    %1864 = vmatprep.subr.bf16.mxu0 0
    %1865 = vmatpush2.bf16.msra.mxu0 0
    %1866 = vmatprep.mubr.bf16.mxu0 0
    %1867 = vmatmul.mubr.bf16.gmra.mxu0 %v1829
    %v1868 = vpop.f32.mrf.mxu0
    %v1869 = vadd.f32 0.0, %v1868
    %v1870 = vpop.f32.mrf.mxu0
    %v1871 = vpop.f32.mrf.mxu0
    %v1872 = vpop.f32.mrf.mxu0
    %1873 = vdwg.mxu0
    %1874 = vrot.lane.b32.xlu0 %v268, 120
    %v1875 = vpop.permute.xlu0 %1874
    %v1877 = vsel %vm1056, %v1246, 0
    %v1880 = vsel %vm1254, %v1875, 0
    %1882 = vmatprep.subr.bf16.mxu0 0
    %1883 = vmatpush1.bf16.msra.mxu0 0
    %1884 = vmatprep.subr.bf16.mxu0 0
    %1885 = vmatpush1.bf16.msra.mxu0 0
    %1886 = vmatprep.subr.bf16.mxu0 0
    %1887 = vmatpush1.bf16.msra.mxu0 0
    %1888 = vmatprep.subr.bf16.mxu0 0
    %1889 = vmatpush1.bf16.msra.mxu0 0
    %1890 = vmatprep.subr.bf16.mxu0 0
    %1891 = vmatpush1.bf16.msra.mxu0 0
    %1892 = vmatprep.subr.bf16.mxu0 0
    %1893 = vmatpush1.bf16.msra.mxu0 0
    %1894 = vmatprep.subr.bf16.mxu0 0
    %1895 = vmatpush1.bf16.msra.mxu0 0
    %1896 = vmatprep.subr.bf16.mxu0 0
    %1897 = vmatpush1.bf16.msra.mxu0 %v1880
    %1898 = vmatprep.subr.bf16.mxu0 0
    %1899 = vmatpush2.bf16.msra.mxu0 0
    %1900 = vmatprep.subr.bf16.mxu0 0
    %1901 = vmatpush2.bf16.msra.mxu0 0
    %1902 = vmatprep.subr.bf16.mxu0 0
    %1903 = vmatpush2.bf16.msra.mxu0 0
    %1904 = vmatprep.subr.bf16.mxu0 0
    %1905 = vmatpush2.bf16.msra.mxu0 0
    %1906 = vmatprep.subr.bf16.mxu0 0
    %1907 = vmatpush2.bf16.msra.mxu0 0
    %1908 = vmatprep.subr.bf16.mxu0 0
    %1909 = vmatpush2.bf16.msra.mxu0 0
    %1910 = vmatprep.subr.bf16.mxu0 0
    %1911 = vmatpush2.bf16.msra.mxu0 0
    %1912 = vmatprep.subr.bf16.mxu0 0
    %1913 = vmatpush2.bf16.msra.mxu0 0
    %1914 = vmatprep.mubr.bf16.mxu0 0
    %1915 = vmatmul.mubr.bf16.gmra.mxu0 %v1877
    %v1916 = vpop.f32.mrf.mxu0
    %v1917 = vadd.f32 0.0, %v1916
    %v1918 = vpop.f32.mrf.mxu0
    %v1919 = vpop.f32.mrf.mxu0
    %v1920 = vpop.f32.mrf.mxu0
    %1921 = vdwg.mxu0
    %1922 = vrot.lane.b32.xlu0 %v269, 120
    %v1923 = vpop.permute.xlu0 %1922
    %v1925 = vsel %vm1056, %v1247, 0
    %v1928 = vsel %vm1254, %v1923, 0
    %1930 = vmatprep.subr.bf16.mxu0 0
    %1931 = vmatpush1.bf16.msra.mxu0 0
    %1932 = vmatprep.subr.bf16.mxu0 0
    %1933 = vmatpush1.bf16.msra.mxu0 0
    %1934 = vmatprep.subr.bf16.mxu0 0
    %1935 = vmatpush1.bf16.msra.mxu0 0
    %1936 = vmatprep.subr.bf16.mxu0 0
    %1937 = vmatpush1.bf16.msra.mxu0 0
    %1938 = vmatprep.subr.bf16.mxu0 0
    %1939 = vmatpush1.bf16.msra.mxu0 0
    %1940 = vmatprep.subr.bf16.mxu0 0
    %1941 = vmatpush1.bf16.msra.mxu0 0
    %1942 = vmatprep.subr.bf16.mxu0 0
    %1943 = vmatpush1.bf16.msra.mxu0 0
    %1944 = vmatprep.subr.bf16.mxu0 0
    %1945 = vmatpush1.bf16.msra.mxu0 %v1928
    %1946 = vmatprep.subr.bf16.mxu0 0
    %1947 = vmatpush2.bf16.msra.mxu0 0
    %1948 = vmatprep.subr.bf16.mxu0 0
    %1949 = vmatpush2.bf16.msra.mxu0 0
    %1950 = vmatprep.subr.bf16.mxu0 0
    %1951 = vmatpush2.bf16.msra.mxu0 0
    %1952 = vmatprep.subr.bf16.mxu0 0
    %1953 = vmatpush2.bf16.msra.mxu0 0
    %1954 = vmatprep.subr.bf16.mxu0 0
    %1955 = vmatpush2.bf16.msra.mxu0 0
    %1956 = vmatprep.subr.bf16.mxu0 0
    %1957 = vmatpush2.bf16.msra.mxu0 0
    %1958 = vmatprep.subr.bf16.mxu0 0
    %1959 = vmatpush2.bf16.msra.mxu0 0
    %1960 = vmatprep.subr.bf16.mxu0 0
    %1961 = vmatpush2.bf16.msra.mxu0 0
    %1962 = vmatprep.mubr.bf16.mxu0 0
    %1963 = vmatmul.mubr.bf16.gmra.mxu0 %v1925
    %v1964 = vpop.f32.mrf.mxu0
    %v1965 = vadd.f32 0.0, %v1964
    %v1966 = vpop.f32.mrf.mxu0
    %v1967 = vpop.f32.mrf.mxu0
    %v1968 = vpop.f32.mrf.mxu0
    %1969 = vdwg.mxu0
    %1970 = vrot.lane.b32.xlu0 %v270, 120
    %v1971 = vpop.permute.xlu0 %1970
    %v1973 = vsel %vm1056, %v1248, 0
    %v1976 = vsel %vm1254, %v1971, 0
    %1978 = vmatprep.subr.bf16.mxu0 0
    %1979 = vmatpush1.bf16.msra.mxu0 0
    %1980 = vmatprep.subr.bf16.mxu0 0
    %1981 = vmatpush1.bf16.msra.mxu0 0
    %1982 = vmatprep.subr.bf16.mxu0 0
    %1983 = vmatpush1.bf16.msra.mxu0 0
    %1984 = vmatprep.subr.bf16.mxu0 0
    %1985 = vmatpush1.bf16.msra.mxu0 0
    %1986 = vmatprep.subr.bf16.mxu0 0
    %1987 = vmatpush1.bf16.msra.mxu0 0
    %1988 = vmatprep.subr.bf16.mxu0 0
    %1989 = vmatpush1.bf16.msra.mxu0 0
    %1990 = vmatprep.subr.bf16.mxu0 0
    %1991 = vmatpush1.bf16.msra.mxu0 0
    %1992 = vmatprep.subr.bf16.mxu0 0
    %1993 = vmatpush1.bf16.msra.mxu0 %v1976
    %1994 = vmatprep.subr.bf16.mxu0 0
    %1995 = vmatpush2.bf16.msra.mxu0 0
    %1996 = vmatprep.subr.bf16.mxu0 0
    %1997 = vmatpush2.bf16.msra.mxu0 0
    %1998 = vmatprep.subr.bf16.mxu0 0
    %1999 = vmatpush2.bf16.msra.mxu0 0
    %2000 = vmatprep.subr.bf16.mxu0 0
    %2001 = vmatpush2.bf16.msra.mxu0 0
    %2002 = vmatprep.subr.bf16.mxu0 0
    %2003 = vmatpush2.bf16.msra.mxu0 0
    %2004 = vmatprep.subr.bf16.mxu0 0
    %2005 = vmatpush2.bf16.msra.mxu0 0
    %2006 = vmatprep.subr.bf16.mxu0 0
    %2007 = vmatpush2.bf16.msra.mxu0 0
    %2008 = vmatprep.subr.bf16.mxu0 0
    %2009 = vmatpush2.bf16.msra.mxu0 0
    %2010 = vmatprep.mubr.bf16.mxu0 0
    %2011 = vmatmul.mubr.bf16.gmra.mxu0 %v1973
    %v2012 = vpop.f32.mrf.mxu0
    %v2013 = vadd.f32 0.0, %v2012
    %v2014 = vpop.f32.mrf.mxu0
    %v2015 = vpop.f32.mrf.mxu0
    %v2016 = vpop.f32.mrf.mxu0
    %2017 = vdwg.mxu0
    %v2018 = vld [vmem:[%s4] sm:$0xf]
    %v2019 = vld [vmem:[%s4 + $0x4] sm:$0xf]
    %v2020 = vld [vmem:[%s4 + $0x8] sm:$0xf]
    %v2021 = vld [vmem:[%s4 + $0xc] sm:$0xf]
    %v2022 = vpack.c.bf16 %v1341, %v1293
    %v2023 = vpack.c.bf16 %v1437, %v1389
    %v2025 = vunpack.c.l.b16 %v2018
    %v2026 = vpack.c.b16 %v2025, %v2025
    %v2027 = vrot.slane %v2026, 2
    %v2029 = vsel %vm289, %v2023, 0
    %vm2031 = vcmask 1041408
    %v2033 = vsel %vm2031, %v2027, 0
    %2035 = vmatprep.subr.bf16.mxu0 0
    %2036 = vmatpush1.bf16.msra.mxu0 0
    %2037 = vmatprep.subr.bf16.mxu0 0
    %2038 = vmatpush1.bf16.msra.mxu0 0
    %2039 = vmatprep.subr.bf16.mxu0 0
    %2040 = vmatpush1.bf16.msra.mxu0 0
    %2041 = vmatprep.subr.bf16.mxu0 0
    %2042 = vmatpush1.bf16.msra.mxu0 0
    %2043 = vmatprep.subr.bf16.mxu0 0
    %2044 = vmatpush1.bf16.msra.mxu0 0
    %2045 = vmatprep.subr.bf16.mxu0 0
    %2046 = vmatpush1.bf16.msra.mxu0 0
    %2047 = vmatprep.subr.bf16.mxu0 0
    %2048 = vmatpush1.bf16.msra.mxu0 0
    %2049 = vmatprep.subr.bf16.mxu0 0
    %2050 = vmatpush1.bf16.msra.mxu0 %v2033
    %2051 = vmatprep.subr.bf16.mxu0 0
    %2052 = vmatpush2.bf16.msra.mxu0 0
    %2053 = vmatprep.subr.bf16.mxu0 0
    %2054 = vmatpush2.bf16.msra.mxu0 0
    %2055 = vmatprep.subr.bf16.mxu0 0
    %2056 = vmatpush2.bf16.msra.mxu0 0
    %2057 = vmatprep.subr.bf16.mxu0 0
    %2058 = vmatpush2.bf16.msra.mxu0 0
    %2059 = vmatprep.subr.bf16.mxu0 0
    %2060 = vmatpush2.bf16.msra.mxu0 0
    %2061 = vmatprep.subr.bf16.mxu0 0
    %2062 = vmatpush2.bf16.msra.mxu0 0
    %2063 = vmatprep.subr.bf16.mxu0 0
    %2064 = vmatpush2.bf16.msra.mxu0 0
    %2065 = vmatprep.subr.bf16.mxu0 0
    %2066 = vmatpush2.bf16.msra.mxu0 0
    %2067 = vmatprep.mubr.bf16.mxu0 0
    %2068 = vmatmul.mubr.bf16.gmra.mxu0 %v2029
    %v2069 = vpop.f32.mrf.mxu0
    %v2070 = vadd.f32 0.0, %v2069
    %v2071 = vpop.f32.mrf.mxu0
    %v2072 = vpop.f32.mrf.mxu0
    %v2073 = vadd.f32 0.0, %v2072
    %v2074 = vpop.f32.mrf.mxu0
    %2075 = vdwg.mxu0
    %v2077 = vsel %vm289, %v2022, 0
    %v2080 = vsel %vm2031, %v2018, 0
    %2082 = vmatprep.subr.bf16.mxu0 0
    %2083 = vmatpush1.bf16.msra.mxu0 0
    %2084 = vmatprep.subr.bf16.mxu0 0
    %2085 = vmatpush1.bf16.msra.mxu0 0
    %2086 = vmatprep.subr.bf16.mxu0 0
    %2087 = vmatpush1.bf16.msra.mxu0 0
    %2088 = vmatprep.subr.bf16.mxu0 0
    %2089 = vmatpush1.bf16.msra.mxu0 0
    %2090 = vmatprep.subr.bf16.mxu0 0
    %2091 = vmatpush1.bf16.msra.mxu0 0
    %2092 = vmatprep.subr.bf16.mxu0 0
    %2093 = vmatpush1.bf16.msra.mxu0 0
    %2094 = vmatprep.subr.bf16.mxu0 0
    %2095 = vmatpush1.bf16.msra.mxu0 0
    %2096 = vmatprep.subr.bf16.mxu0 0
    %2097 = vmatpush1.bf16.msra.mxu0 %v2080
    %2098 = vmatprep.subr.bf16.mxu0 0
    %2099 = vmatpush2.bf16.msra.mxu0 0
    %2100 = vmatprep.subr.bf16.mxu0 0
    %2101 = vmatpush2.bf16.msra.mxu0 0
    %2102 = vmatprep.subr.bf16.mxu0 0
    %2103 = vmatpush2.bf16.msra.mxu0 0
    %2104 = vmatprep.subr.bf16.mxu0 0
    %2105 = vmatpush2.bf16.msra.mxu0 0
    %2106 = vmatprep.subr.bf16.mxu0 0
    %2107 = vmatpush2.bf16.msra.mxu0 0
    %2108 = vmatprep.subr.bf16.mxu0 0
    %2109 = vmatpush2.bf16.msra.mxu0 0
    %2110 = vmatprep.subr.bf16.mxu0 0
    %2111 = vmatpush2.bf16.msra.mxu0 0
    %2112 = vmatprep.subr.bf16.mxu0 0
    %2113 = vmatpush2.bf16.msra.mxu0 0
    %2114 = vmatprep.mubr.bf16.mxu0 0
    %2115 = vmatmul.mubr.bf16.gmra.mxu0 %v2077
    %v2116 = vpop.f32.mrf.mxu0
    %v2117 = vadd.f32 %v2070, %v2116
    %v2118 = vpop.f32.mrf.mxu0
    %v2119 = vpop.f32.mrf.mxu0
    %v2120 = vadd.f32 %v2073, %v2119
    %v2121 = vpop.f32.mrf.mxu0
    %2122 = vdwg.mxu0
    %v2123 = vpack.c.bf16 %v1533, %v1485
    %v2125 = vsel %vm289, %v2123, 0
    %v2128 = vsel %vm2031, %v2019, 0
    %2130 = vmatprep.subr.bf16.mxu0 0
    %2131 = vmatpush1.bf16.msra.mxu0 0
    %2132 = vmatprep.subr.bf16.mxu0 0
    %2133 = vmatpush1.bf16.msra.mxu0 0
    %2134 = vmatprep.subr.bf16.mxu0 0
    %2135 = vmatpush1.bf16.msra.mxu0 0
    %2136 = vmatprep.subr.bf16.mxu0 0
    %2137 = vmatpush1.bf16.msra.mxu0 0
    %2138 = vmatprep.subr.bf16.mxu0 0
    %2139 = vmatpush1.bf16.msra.mxu0 0
    %2140 = vmatprep.subr.bf16.mxu0 0
    %2141 = vmatpush1.bf16.msra.mxu0 0
    %2142 = vmatprep.subr.bf16.mxu0 0
    %2143 = vmatpush1.bf16.msra.mxu0 0
    %2144 = vmatprep.subr.bf16.mxu0 0
    %2145 = vmatpush1.bf16.msra.mxu0 %v2128
    %2146 = vmatprep.subr.bf16.mxu0 0
    %2147 = vmatpush2.bf16.msra.mxu0 0
    %2148 = vmatprep.subr.bf16.mxu0 0
    %2149 = vmatpush2.bf16.msra.mxu0 0
    %2150 = vmatprep.subr.bf16.mxu0 0
    %2151 = vmatpush2.bf16.msra.mxu0 0
    %2152 = vmatprep.subr.bf16.mxu0 0
    %2153 = vmatpush2.bf16.msra.mxu0 0
    %2154 = vmatprep.subr.bf16.mxu0 0
    %2155 = vmatpush2.bf16.msra.mxu0 0
    %2156 = vmatprep.subr.bf16.mxu0 0
    %2157 = vmatpush2.bf16.msra.mxu0 0
    %2158 = vmatprep.subr.bf16.mxu0 0
    %2159 = vmatpush2.bf16.msra.mxu0 0
    %2160 = vmatprep.subr.bf16.mxu0 0
    %2161 = vmatpush2.bf16.msra.mxu0 0
    %2162 = vmatprep.mubr.bf16.mxu0 0
    %2163 = vmatmul.mubr.bf16.gmra.mxu0 %v2125
    %v2164 = vpop.f32.mrf.mxu0
    %v2165 = vadd.f32 0.0, %v2164
    %v2166 = vpop.f32.mrf.mxu0
    %v2167 = vpop.f32.mrf.mxu0
    %v2168 = vadd.f32 0.0, %v2167
    %v2169 = vpop.f32.mrf.mxu0
    %2170 = vdwg.mxu0
    %v2171 = vadd.f32 %v2117, %v2165
    %v2172 = vadd.f32 %v2120, %v2168
    %v2173 = vpack.c.bf16 %v1629, %v1581
    %v2175 = vunpack.c.l.b16 %v2019
    %v2176 = vpack.c.b16 %v2175, %v2175
    %v2177 = vrot.slane %v2176, 2
    %v2179 = vsel %vm289, %v2173, 0
    %v2182 = vsel %vm2031, %v2177, 0
    %2184 = vmatprep.subr.bf16.mxu0 0
    %2185 = vmatpush1.bf16.msra.mxu0 0
    %2186 = vmatprep.subr.bf16.mxu0 0
    %2187 = vmatpush1.bf16.msra.mxu0 0
    %2188 = vmatprep.subr.bf16.mxu0 0
    %2189 = vmatpush1.bf16.msra.mxu0 0
    %2190 = vmatprep.subr.bf16.mxu0 0
    %2191 = vmatpush1.bf16.msra.mxu0 0
    %2192 = vmatprep.subr.bf16.mxu0 0
    %2193 = vmatpush1.bf16.msra.mxu0 0
    %2194 = vmatprep.subr.bf16.mxu0 0
    %2195 = vmatpush1.bf16.msra.mxu0 0
    %2196 = vmatprep.subr.bf16.mxu0 0
    %2197 = vmatpush1.bf16.msra.mxu0 0
    %2198 = vmatprep.subr.bf16.mxu0 0
    %2199 = vmatpush1.bf16.msra.mxu0 %v2182
    %2200 = vmatprep.subr.bf16.mxu0 0
    %2201 = vmatpush2.bf16.msra.mxu0 0
    %2202 = vmatprep.subr.bf16.mxu0 0
    %2203 = vmatpush2.bf16.msra.mxu0 0
    %2204 = vmatprep.subr.bf16.mxu0 0
    %2205 = vmatpush2.bf16.msra.mxu0 0
    %2206 = vmatprep.subr.bf16.mxu0 0
    %2207 = vmatpush2.bf16.msra.mxu0 0
    %2208 = vmatprep.subr.bf16.mxu0 0
    %2209 = vmatpush2.bf16.msra.mxu0 0
    %2210 = vmatprep.subr.bf16.mxu0 0
    %2211 = vmatpush2.bf16.msra.mxu0 0
    %2212 = vmatprep.subr.bf16.mxu0 0
    %2213 = vmatpush2.bf16.msra.mxu0 0
    %2214 = vmatprep.subr.bf16.mxu0 0
    %2215 = vmatpush2.bf16.msra.mxu0 0
    %2216 = vmatprep.mubr.bf16.mxu0 0
    %2217 = vmatmul.mubr.bf16.gmra.mxu0 %v2179
    %v2218 = vpop.f32.mrf.mxu0
    %v2219 = vadd.f32 0.0, %v2218
    %v2220 = vpop.f32.mrf.mxu0
    %v2221 = vpop.f32.mrf.mxu0
    %v2222 = vadd.f32 0.0, %v2221
    %v2223 = vpop.f32.mrf.mxu0
    %2224 = vdwg.mxu0
    %v2225 = vadd.f32 %v2171, %v2219
    %v2226 = vadd.f32 %v2172, %v2222
    %v2227 = vpack.c.bf16 %v1725, %v1677
    %v2229 = vsel %vm289, %v2227, 0
    %v2232 = vsel %vm2031, %v2020, 0
    %2234 = vmatprep.subr.bf16.mxu0 0
    %2235 = vmatpush1.bf16.msra.mxu0 0
    %2236 = vmatprep.subr.bf16.mxu0 0
    %2237 = vmatpush1.bf16.msra.mxu0 0
    %2238 = vmatprep.subr.bf16.mxu0 0
    %2239 = vmatpush1.bf16.msra.mxu0 0
    %2240 = vmatprep.subr.bf16.mxu0 0
    %2241 = vmatpush1.bf16.msra.mxu0 0
    %2242 = vmatprep.subr.bf16.mxu0 0
    %2243 = vmatpush1.bf16.msra.mxu0 0
    %2244 = vmatprep.subr.bf16.mxu0 0
    %2245 = vmatpush1.bf16.msra.mxu0 0
    %2246 = vmatprep.subr.bf16.mxu0 0
    %2247 = vmatpush1.bf16.msra.mxu0 0
    %2248 = vmatprep.subr.bf16.mxu0 0
    %2249 = vmatpush1.bf16.msra.mxu0 %v2232
    %2250 = vmatprep.subr.bf16.mxu0 0
    %2251 = vmatpush2.bf16.msra.mxu0 0
    %2252 = vmatprep.subr.bf16.mxu0 0
    %2253 = vmatpush2.bf16.msra.mxu0 0
    %2254 = vmatprep.subr.bf16.mxu0 0
    %2255 = vmatpush2.bf16.msra.mxu0 0
    %2256 = vmatprep.subr.bf16.mxu0 0
    %2257 = vmatpush2.bf16.msra.mxu0 0
    %2258 = vmatprep.subr.bf16.mxu0 0
    %2259 = vmatpush2.bf16.msra.mxu0 0
    %2260 = vmatprep.subr.bf16.mxu0 0
    %2261 = vmatpush2.bf16.msra.mxu0 0
    %2262 = vmatprep.subr.bf16.mxu0 0
    %2263 = vmatpush2.bf16.msra.mxu0 0
    %2264 = vmatprep.subr.bf16.mxu0 0
    %2265 = vmatpush2.bf16.msra.mxu0 0
    %2266 = vmatprep.mubr.bf16.mxu0 0
    %2267 = vmatmul.mubr.bf16.gmra.mxu0 %v2229
    %v2268 = vpop.f32.mrf.mxu0
    %v2269 = vadd.f32 0.0, %v2268
    %v2270 = vpop.f32.mrf.mxu0
    %v2271 = vpop.f32.mrf.mxu0
    %v2272 = vadd.f32 0.0, %v2271
    %v2273 = vpop.f32.mrf.mxu0
    %2274 = vdwg.mxu0
    %v2275 = vadd.f32 %v2225, %v2269
    %v2276 = vadd.f32 %v2226, %v2272
    %v2277 = vpack.c.bf16 %v1821, %v1773
    %v2279 = vunpack.c.l.b16 %v2020
    %v2280 = vpack.c.b16 %v2279, %v2279
    %v2281 = vrot.slane %v2280, 2
    %v2283 = vsel %vm289, %v2277, 0
    %v2286 = vsel %vm2031, %v2281, 0
    %2288 = vmatprep.subr.bf16.mxu0 0
    %2289 = vmatpush1.bf16.msra.mxu0 0
    %2290 = vmatprep.subr.bf16.mxu0 0
    %2291 = vmatpush1.bf16.msra.mxu0 0
    %2292 = vmatprep.subr.bf16.mxu0 0
    %2293 = vmatpush1.bf16.msra.mxu0 0
    %2294 = vmatprep.subr.bf16.mxu0 0
    %2295 = vmatpush1.bf16.msra.mxu0 0
    %2296 = vmatprep.subr.bf16.mxu0 0
    %2297 = vmatpush1.bf16.msra.mxu0 0
    %2298 = vmatprep.subr.bf16.mxu0 0
    %2299 = vmatpush1.bf16.msra.mxu0 0
    %2300 = vmatprep.subr.bf16.mxu0 0
    %2301 = vmatpush1.bf16.msra.mxu0 0
    %2302 = vmatprep.subr.bf16.mxu0 0
    %2303 = vmatpush1.bf16.msra.mxu0 %v2286
    %2304 = vmatprep.subr.bf16.mxu0 0
    %2305 = vmatpush2.bf16.msra.mxu0 0
    %2306 = vmatprep.subr.bf16.mxu0 0
    %2307 = vmatpush2.bf16.msra.mxu0 0
    %2308 = vmatprep.subr.bf16.mxu0 0
    %2309 = vmatpush2.bf16.msra.mxu0 0
    %2310 = vmatprep.subr.bf16.mxu0 0
    %2311 = vmatpush2.bf16.msra.mxu0 0
    %2312 = vmatprep.subr.bf16.mxu0 0
    %2313 = vmatpush2.bf16.msra.mxu0 0
    %2314 = vmatprep.subr.bf16.mxu0 0
    %2315 = vmatpush2.bf16.msra.mxu0 0
    %2316 = vmatprep.subr.bf16.mxu0 0
    %2317 = vmatpush2.bf16.msra.mxu0 0
    %2318 = vmatprep.subr.bf16.mxu0 0
    %2319 = vmatpush2.bf16.msra.mxu0 0
    %2320 = vmatprep.mubr.bf16.mxu0 0
    %2321 = vmatmul.mubr.bf16.gmra.mxu0 %v2283
    %v2322 = vpop.f32.mrf.mxu0
    %v2323 = vadd.f32 0.0, %v2322
    %v2324 = vpop.f32.mrf.mxu0
    %v2325 = vpop.f32.mrf.mxu0
    %v2326 = vadd.f32 0.0, %v2325
    %v2327 = vpop.f32.mrf.mxu0
    %2328 = vdwg.mxu0
    %v2329 = vadd.f32 %v2275, %v2323
    %v2330 = vadd.f32 %v2276, %v2326
    %v2331 = vpack.c.bf16 %v1917, %v1869
    %v2333 = vsel %vm289, %v2331, 0
    %v2336 = vsel %vm2031, %v2021, 0
    %2338 = vmatprep.subr.bf16.mxu0 0
    %2339 = vmatpush1.bf16.msra.mxu0 0
    %2340 = vmatprep.subr.bf16.mxu0 0
    %2341 = vmatpush1.bf16.msra.mxu0 0
    %2342 = vmatprep.subr.bf16.mxu0 0
    %2343 = vmatpush1.bf16.msra.mxu0 0
    %2344 = vmatprep.subr.bf16.mxu0 0
    %2345 = vmatpush1.bf16.msra.mxu0 0
    %2346 = vmatprep.subr.bf16.mxu0 0
    %2347 = vmatpush1.bf16.msra.mxu0 0
    %2348 = vmatprep.subr.bf16.mxu0 0
    %2349 = vmatpush1.bf16.msra.mxu0 0
    %2350 = vmatprep.subr.bf16.mxu0 0
    %2351 = vmatpush1.bf16.msra.mxu0 0
    %2352 = vmatprep.subr.bf16.mxu0 0
    %2353 = vmatpush1.bf16.msra.mxu0 %v2336
    %2354 = vmatprep.subr.bf16.mxu0 0
    %2355 = vmatpush2.bf16.msra.mxu0 0
    %2356 = vmatprep.subr.bf16.mxu0 0
    %2357 = vmatpush2.bf16.msra.mxu0 0
    %2358 = vmatprep.subr.bf16.mxu0 0
    %2359 = vmatpush2.bf16.msra.mxu0 0
    %2360 = vmatprep.subr.bf16.mxu0 0
    %2361 = vmatpush2.bf16.msra.mxu0 0
    %2362 = vmatprep.subr.bf16.mxu0 0
    %2363 = vmatpush2.bf16.msra.mxu0 0
    %2364 = vmatprep.subr.bf16.mxu0 0
    %2365 = vmatpush2.bf16.msra.mxu0 0
    %2366 = vmatprep.subr.bf16.mxu0 0
    %2367 = vmatpush2.bf16.msra.mxu0 0
    %2368 = vmatprep.subr.bf16.mxu0 0
    %2369 = vmatpush2.bf16.msra.mxu0 0
    %2370 = vmatprep.mubr.bf16.mxu0 0
    %2371 = vmatmul.mubr.bf16.gmra.mxu0 %v2333
    %v2372 = vpop.f32.mrf.mxu0
    %v2373 = vadd.f32 0.0, %v2372
    %v2374 = vpop.f32.mrf.mxu0
    %v2375 = vpop.f32.mrf.mxu0
    %v2376 = vadd.f32 0.0, %v2375
    %v2377 = vpop.f32.mrf.mxu0
    %2378 = vdwg.mxu0
    %v2379 = vadd.f32 %v2329, %v2373
    %v2380 = vadd.f32 %v2330, %v2376
    %v2381 = vpack.c.bf16 %v2013, %v1965
    %v2383 = vunpack.c.l.b16 %v2021
    %v2384 = vpack.c.b16 %v2383, %v2383
    %v2385 = vrot.slane %v2384, 2
    %v2387 = vsel %vm289, %v2381, 0
    %v2390 = vsel %vm2031, %v2385, 0
    %2392 = vmatprep.subr.bf16.mxu0 0
    %2393 = vmatpush1.bf16.msra.mxu0 0
    %2394 = vmatprep.subr.bf16.mxu0 0
    %2395 = vmatpush1.bf16.msra.mxu0 0
    %2396 = vmatprep.subr.bf16.mxu0 0
    %2397 = vmatpush1.bf16.msra.mxu0 0
    %2398 = vmatprep.subr.bf16.mxu0 0
    %2399 = vmatpush1.bf16.msra.mxu0 0
    %2400 = vmatprep.subr.bf16.mxu0 0
    %2401 = vmatpush1.bf16.msra.mxu0 0
    %2402 = vmatprep.subr.bf16.mxu0 0
    %2403 = vmatpush1.bf16.msra.mxu0 0
    %2404 = vmatprep.subr.bf16.mxu0 0
    %2405 = vmatpush1.bf16.msra.mxu0 0
    %2406 = vmatprep.subr.bf16.mxu0 0
    %2407 = vmatpush1.bf16.msra.mxu0 %v2390
    %2408 = vmatprep.subr.bf16.mxu0 0
    %2409 = vmatpush2.bf16.msra.mxu0 0
    %2410 = vmatprep.subr.bf16.mxu0 0
    %2411 = vmatpush2.bf16.msra.mxu0 0
    %2412 = vmatprep.subr.bf16.mxu0 0
    %2413 = vmatpush2.bf16.msra.mxu0 0
    %2414 = vmatprep.subr.bf16.mxu0 0
    %2415 = vmatpush2.bf16.msra.mxu0 0
    %2416 = vmatprep.subr.bf16.mxu0 0
    %2417 = vmatpush2.bf16.msra.mxu0 0
    %2418 = vmatprep.subr.bf16.mxu0 0
    %2419 = vmatpush2.bf16.msra.mxu0 0
    %2420 = vmatprep.subr.bf16.mxu0 0
    %2421 = vmatpush2.bf16.msra.mxu0 0
    %2422 = vmatprep.subr.bf16.mxu0 0
    %2423 = vmatpush2.bf16.msra.mxu0 0
    %2424 = vmatprep.mubr.bf16.mxu0 0
    %2425 = vmatmul.mubr.bf16.gmra.mxu0 %v2387
    %v2426 = vpop.f32.mrf.mxu0
    %v2427 = vadd.f32 0.0, %v2426
    %v2428 = vpop.f32.mrf.mxu0
    %v2429 = vpop.f32.mrf.mxu0
    %v2430 = vadd.f32 0.0, %v2429
    %v2431 = vpop.f32.mrf.mxu0
    %2432 = vdwg.mxu0
    %v2433 = vadd.f32 %v2379, %v2427
    %v2434 = vadd.f32 %v2380, %v2430
    %v2435 = vld [vmem:[%s7] sm:$0xff]
    %v2436 = vlaneseq
    %v2437 = vshrl.u32 %v2436, 7
    %v2438 = vsub.s32 0, %v2437
    %v2439 = vrot.slane %v2435, %v2438
    %v2440 = vadd.f32 %v2433, %v2439
    %v2441 = vadd.f32 %v2434, %v2439
    %v2442 = vld [vmem:[%s1] sm:$0xff]
    %v2443 = vld [vmem:[%s1 + $0x8] sm:$0xff]
    %v2444 = vadd.f32 %v2440, %v2442
    %v2445 = vadd.f32 %v2441, %v2443
    %vm2446 = vcmask 261120
    %v2447 = vsel %vm2446, %v2444, 0.0
    %2448 = vadd.xlane.f32.xlu0 %v2447
    %v2449 = vpop.xlane.xlu0 %2448
    %v2450 = vsel %vm2446, %v2445, 0.0
    %2451 = vadd.xlane.f32.xlu0 %v2450
    %v2452 = vpop.xlane.xlu0 %2451
    %v2453 = vrcp.pop 32.0
    %v2454 = vmul.f32 %v2449, %v2453
    %v2455 = vmul.f32 %v2452, %v2453
    %v2456 = vsub.f32 %v2444, %v2454
    %v2457 = vsub.f32 %v2445, %v2455
    %v2458 = vmul.f32 %v2456, %v2456
    %v2459 = vmul.f32 %v2457, %v2457
    %v2460 = vsel %vm2446, %v2458, 0.0
    %2461 = vadd.xlane.f32.xlu0 %v2460
    %v2462 = vpop.xlane.xlu0 %2461
    %v2463 = vsel %vm2446, %v2459, 0.0
    %2464 = vadd.xlane.f32.xlu0 %v2463
    %v2465 = vpop.xlane.xlu0 %2464
    %v2466 = vmul.f32 %v2462, %v2453
    %v2467 = vmul.f32 %v2465, %v2453
    %v2468 = vadd.f32 %v2466, 1e-05
    %v2469 = vadd.f32 %v2467, 1e-05
    %v2470 = vrsqrt.pop %v2468
    %v2471 = vrsqrt.pop %v2469
    %v2472 = vmul.f32 %v2456, %v2470
    %v2473 = vmul.f32 %v2457, %v2471
    %v2474 = vlaneseq
    %v2475 = vshrl.u32 %v2474, 7
    %v2476 = vsub.s32 1, %v2475
    %v2477 = vrot.slane %v2435, %v2476
    %v2478 = vmul.f32 %v2472, %v2477
    %v2479 = vmul.f32 %v2473, %v2477
    %v2480 = vlaneseq
    %v2481 = vshrl.u32 %v2480, 7
    %v2482 = vsub.s32 2, %v2481
    %v2483 = vrot.slane %v2435, %v2482
    %v2484 = vadd.f32 %v2478, %v2483
    %v2485 = vadd.f32 %v2479, %v2483
    %v2486 = vpack.c.bf16 %v2485, %v2484
    %v2487 = vld [vmem:[%s5] sm:$0xf]
    %v2488 = vld [vmem:[%s5 + $0x4] sm:$0xf]
    %v2489 = vld [vmem:[%s5 + $0x8] sm:$0xf]
    %v2490 = vld [vmem:[%s5 + $0xc] sm:$0xf]
    %v2491 = vld [vmem:[%s8] sm:$0x1]
    %v2493 = vlaneseq
    %v2494 = vshrl.u32 %v2493, 7
    %v2495 = vsub.s32 0, %v2494
    %v2496 = vrot.slane %v2491, %v2495
    %v2502 = vunpack.c.l.b16 %v2487
    %v2503 = vunpack.c.l.b16 %v2488
    %v2504 = vunpack.c.l.b16 %v2489
    %v2505 = vunpack.c.l.b16 %v2490
    %v2506 = vpack.c.b16 %v2503, %v2502
    %v2507 = vpack.c.b16 %v2505, %v2504
    %v2511 = vsel %vm2446, %v2486, 0
    %2513 = vmatprep.subr.bf16.mxu0 0
    %2514 = vmatpush1.bf16.msra.mxu0 0
    %2515 = vmatprep.subr.bf16.mxu0 0
    %2516 = vmatpush1.bf16.msra.mxu0 0
    %2517 = vmatprep.subr.bf16.mxu0 0
    %2518 = vmatpush1.bf16.msra.mxu0 0
    %2519 = vmatprep.subr.bf16.mxu0 0
    %2520 = vmatpush1.bf16.msra.mxu0 0
    %2521 = vmatprep.subr.bf16.mxu0 0
    %2522 = vmatpush1.bf16.msra.mxu0 0
    %2523 = vmatprep.subr.bf16.mxu0 0
    %2524 = vmatpush1.bf16.msra.mxu0 0
    %2525 = vmatprep.subr.bf16.mxu0 0
    %2526 = vmatpush1.bf16.msra.mxu0 %v2507
    %2527 = vmatprep.subr.bf16.mxu0 0
    %2528 = vmatpush1.bf16.msra.mxu0 %v2506
    %2529 = vmatprep.subr.bf16.mxu0 0
    %2530 = vmatpush2.bf16.msra.mxu0 0
    %2531 = vmatprep.subr.bf16.mxu0 0
    %2532 = vmatpush2.bf16.msra.mxu0 0
    %2533 = vmatprep.subr.bf16.mxu0 0
    %2534 = vmatpush2.bf16.msra.mxu0 0
    %2535 = vmatprep.subr.bf16.mxu0 0
    %2536 = vmatpush2.bf16.msra.mxu0 0
    %2537 = vmatprep.subr.bf16.mxu0 0
    %2538 = vmatpush2.bf16.msra.mxu0 0
    %2539 = vmatprep.subr.bf16.mxu0 0
    %2540 = vmatpush2.bf16.msra.mxu0 0
    %2541 = vmatprep.subr.bf16.mxu0 0
    %2542 = vmatpush2.bf16.msra.mxu0 0
    %2543 = vmatprep.subr.bf16.mxu0 0
    %2544 = vmatpush2.bf16.msra.mxu0 0
    %2545 = vmatprep.mubr.bf16.mxu0 0
    %2546 = vmatmul.mubr.bf16.gmra.mxu0 %v2511
    %v2547 = vpop.f32.mrf.mxu0
    %v2548 = vadd.f32 %v2496, %v2547
    %v2549 = vpop.f32.mrf.mxu0
    %v2550 = vpop.f32.mrf.mxu0
    %v2551 = vadd.f32 %v2496, %v2550
    %v2552 = vpop.f32.mrf.mxu0
    %2553 = vdwg.mxu0
    %v2554 = vmax.f32 %v2548, 0.0
    %v2555 = vmax.f32 %v2551, 0.0
    %v2556 = vpack.c.bf16 %v2555, %v2554
    %v2557 = vld [vmem:[%s6] sm:$0xf]
    %v2558 = vld [vmem:[%s6 + $0x4] sm:$0xf]
    %v2559 = vld [vmem:[%s6 + $0x8] sm:$0xf]
    %v2560 = vld [vmem:[%s6 + $0xc] sm:$0xf]
    %v2561 = vld [vmem:[%s6 + $0x10] sm:$0xf]
    %v2562 = vld [vmem:[%s6 + $0x14] sm:$0xf]
    %v2563 = vld [vmem:[%s6 + $0x18] sm:$0xf]
    %v2564 = vld [vmem:[%s6 + $0x1c] sm:$0xf]
    %v2565 = vld [vmem:[%s6 + $0x20] sm:$0xf]
    %v2566 = vld [vmem:[%s6 + $0x24] sm:$0xf]
    %v2567 = vld [vmem:[%s6 + $0x28] sm:$0xf]
    %v2568 = vld [vmem:[%s6 + $0x2c] sm:$0xf]
    %v2569 = vld [vmem:[%s6 + $0x30] sm:$0xf]
    %v2570 = vld [vmem:[%s6 + $0x34] sm:$0xf]
    %v2571 = vld [vmem:[%s6 + $0x38] sm:$0xf]
    %v2572 = vld [vmem:[%s6 + $0x3c] sm:$0xf]
    %v2573 = vlaneseq
    %v2574 = vshrl.u32 %v2573, 7
    %v2575 = vsub.s32 3, %v2574
    %v2576 = vrot.slane %v2435, %v2575
    %v2593 = vunpack.c.l.b16 %v2557
    %v2594 = vunpack.c.l.b16 %v2558
    %v2595 = vunpack.c.l.b16 %v2559
    %v2596 = vunpack.c.l.b16 %v2560
    %v2597 = vunpack.c.l.b16 %v2561
    %v2598 = vunpack.c.l.b16 %v2562
    %v2599 = vunpack.c.l.b16 %v2563
    %v2600 = vunpack.c.l.b16 %v2564
    %v2601 = vunpack.c.l.b16 %v2565
    %v2602 = vunpack.c.l.b16 %v2566
    %v2603 = vunpack.c.l.b16 %v2567
    %v2604 = vunpack.c.l.b16 %v2568
    %v2605 = vunpack.c.l.b16 %v2569
    %v2606 = vunpack.c.l.b16 %v2570
    %v2607 = vunpack.c.l.b16 %v2571
    %v2608 = vunpack.c.l.b16 %v2572
    %v2609 = vpack.c.b16 %v2594, %v2593
    %v2610 = vpack.c.b16 %v2596, %v2595
    %v2611 = vpack.c.b16 %v2598, %v2597
    %v2612 = vpack.c.b16 %v2600, %v2599
    %v2613 = vpack.c.b16 %v2602, %v2601
    %v2614 = vpack.c.b16 %v2604, %v2603
    %v2615 = vpack.c.b16 %v2606, %v2605
    %v2616 = vpack.c.b16 %v2608, %v2607
    %2625 = vmatprep.subr.bf16.mxu0 0
    %2626 = vmatpush1.bf16.msra.mxu0 %v2616
    %2627 = vmatprep.subr.bf16.mxu0 0
    %2628 = vmatpush1.bf16.msra.mxu0 %v2615
    %2629 = vmatprep.subr.bf16.mxu0 0
    %2630 = vmatpush1.bf16.msra.mxu0 %v2614
    %2631 = vmatprep.subr.bf16.mxu0 0
    %2632 = vmatpush1.bf16.msra.mxu0 %v2613
    %2633 = vmatprep.subr.bf16.mxu0 0
    %2634 = vmatpush1.bf16.msra.mxu0 %v2612
    %2635 = vmatprep.subr.bf16.mxu0 0
    %2636 = vmatpush1.bf16.msra.mxu0 %v2611
    %2637 = vmatprep.subr.bf16.mxu0 0
    %2638 = vmatpush1.bf16.msra.mxu0 %v2610
    %2639 = vmatprep.subr.bf16.mxu0 0
    %2640 = vmatpush1.bf16.msra.mxu0 %v2609
    %2641 = vmatprep.subr.bf16.mxu0 0
    %2642 = vmatpush2.bf16.msra.mxu0 0
    %2643 = vmatprep.subr.bf16.mxu0 0
    %2644 = vmatpush2.bf16.msra.mxu0 0
    %2645 = vmatprep.subr.bf16.mxu0 0
    %2646 = vmatpush2.bf16.msra.mxu0 0
    %2647 = vmatprep.subr.bf16.mxu0 0
    %2648 = vmatpush2.bf16.msra.mxu0 0
    %2649 = vmatprep.subr.bf16.mxu0 0
    %2650 = vmatpush2.bf16.msra.mxu0 0
    %2651 = vmatprep.subr.bf16.mxu0 0
    %2652 = vmatpush2.bf16.msra.mxu0 0
    %2653 = vmatprep.subr.bf16.mxu0 0
    %2654 = vmatpush2.bf16.msra.mxu0 0
    %2655 = vmatprep.subr.bf16.mxu0 0
    %2656 = vmatpush2.bf16.msra.mxu0 0
    %2657 = vmatprep.mubr.bf16.mxu0 0
    %2658 = vmatmul.mubr.bf16.gmra.mxu0 %v2556
    %v2659 = vpop.f32.mrf.mxu0
    %v2660 = vadd.f32 %v2576, %v2659
    %v2661 = vpop.f32.mrf.mxu0
    %v2662 = vpop.f32.mrf.mxu0
    %v2663 = vadd.f32 %v2576, %v2662
    %v2664 = vpop.f32.mrf.mxu0
    %2665 = vdwg.mxu0
    %v2666 = vadd.f32 %v2660, %v2484
    %v2667 = vadd.f32 %v2663, %v2485
    %v2668 = vsel %vm2446, %v2666, 0.0
    %2669 = vadd.xlane.f32.xlu0 %v2668
    %v2670 = vpop.xlane.xlu0 %2669
    %v2671 = vsel %vm2446, %v2667, 0.0
    %2672 = vadd.xlane.f32.xlu0 %v2671
    %v2673 = vpop.xlane.xlu0 %2672
    %v2674 = vmul.f32 %v2670, %v2453
    %v2675 = vmul.f32 %v2673, %v2453
    %v2676 = vsub.f32 %v2666, %v2674
    %v2677 = vsub.f32 %v2667, %v2675
    %v2678 = vmul.f32 %v2676, %v2676
    %v2679 = vmul.f32 %v2677, %v2677
    %v2680 = vsel %vm2446, %v2678, 0.0
    %2681 = vadd.xlane.f32.xlu0 %v2680
    %v2682 = vpop.xlane.xlu0 %2681
    %v2683 = vsel %vm2446, %v2679, 0.0
    %2684 = vadd.xlane.f32.xlu0 %v2683
    %v2685 = vpop.xlane.xlu0 %2684
    %v2686 = vmul.f32 %v2682, %v2453
    %v2687 = vmul.f32 %v2685, %v2453
    %v2688 = vadd.f32 %v2686, 1e-05
    %v2689 = vadd.f32 %v2687, 1e-05
    %v2690 = vrsqrt.pop %v2688
    %v2691 = vrsqrt.pop %v2689
    %v2692 = vmul.f32 %v2676, %v2690
    %v2693 = vmul.f32 %v2677, %v2691
    %v2694 = vlaneseq
    %v2695 = vshrl.u32 %v2694, 7
    %v2696 = vsub.s32 4, %v2695
    %v2697 = vrot.slane %v2435, %v2696
    %v2698 = vmul.f32 %v2692, %v2697
    %v2699 = vmul.f32 %v2693, %v2697
    %v2700 = vlaneseq
    %v2701 = vshrl.u32 %v2700, 7
    %v2702 = vsub.s32 5, %v2701
    %v2703 = vrot.slane %v2435, %v2702
    %v2704 = vadd.f32 %v2698, %v2703
    %v2705 = vadd.f32 %v2699, %v2703
    %2706 = vst.msk [vmem:[#allocation2] sm:$0xff] %vm2446, %v2704
    %2707 = vst.msk [vmem:[#allocation2 + $0x8] sm:$0xff] %vm2446, %v2705
    // Predicated region
    $region38: #{tpu_custom_call.1} parent=1 // pred_check
      _
    $region39: #{tpu_custom_call.1} parent=1 // pred_check_branch
      %2709 = sbr.rel (0) target = $region41
    $region40: #{tpu_custom_call.1} parent=1 // pred_region
      %s2711 = ssub.s32 256, 256
      %2712 = vsyncadd [#allocation3], %s2711
      %s2713 = sshll.u32 [#allocation2], 4
      %s2714 = int_to_ptr.vmem [resolvable:$true] %s2713
      %2719 = dma.vmem_to_hbm [thread:$0]  %s2714, 256, %s9, [#allocation3], 128, 128, 8
    $region41: #{tpu_custom_call.1} parent=1 // pred_fallthru
      _
    // Predicated region
    $region42: #{tpu_custom_call.1} parent=1 // pred_check
      _
    $region43: #{tpu_custom_call.1} parent=1 // pred_check_branch
      %2721 = sbr.rel (0) target = $region45
    $region44: #{tpu_custom_call.1} parent=1 // pred_region
      %2722 = dma.done [#allocation3], 256
    $region45: #{tpu_custom_call.1} parent=1 // pred_fallthru
      _
    %2723 = vsyncpa [#allocation3], 1

</llo_original>
